<compile_context>
chip_gen: v5e
topology: v5e:2x2
jax: 0.10.0
libtpu: 0.0.40
codegen_flags: <defaults>
</compile_context>

<pallas_src>
import jax
import jax.numpy as jnp
from jax.experimental import pallas as pl
from jax.experimental.pallas import tpu as pltpu


# Conservative whole-table-in-VMEM budget: well under the default scoped-VMEM limit
# on every generation (v5e 16 MiB scoped, v6e 32 MiB, v7x 32 MiB of 64 MiB physical),
# leaving room for double-buffered I/O and compiler scratch.
_VMEM_TABLE_BYTES_LIMIT = 4 * 1024 * 1024


# ----------------------------------------------------------------------------- #
# Small-table path: one grid step, whole table in VMEM, one-hot gather on the MXU
# ----------------------------------------------------------------------------- #
def _embed_onehot_kernel(idx_ref, table_ref, out_ref):
    """Gather all B rows in one shot.

    idx_ref   : VMEM (B, 1)  int32  -- class ids
    table_ref : VMEM (N, D)         -- full embedding table (VMEM resident)
    out_ref   : VMEM (B, D)         -- gathered rows, single lane-dense store
    """
    ids = idx_ref[...]                                      # (B, 1) int32
    b = ids.shape[0]
    n_classes = table_ref.shape[0]
    cls = jax.lax.broadcasted_iota(jnp.int32, (b, n_classes), 1)
    one_hot = (cls == ids).astype(table_ref.dtype)          # (B, N), exactly 0/1
    # HIGHEST precision so the one-hot row-select reproduces the f32 table values
    # (default MXU precision would round them to bf16).
    out_ref[...] = jnp.dot(
        one_hot, table_ref[...],
        preferred_element_type=jnp.float32,
        precision=jax.lax.Precision.HIGHEST,
    ).astype(out_ref.dtype)


def _forward_small_table(indices, table):
    (b,) = indices.shape
    n_classes, d = table.shape
    itemsize = jnp.dtype(table.dtype).itemsize
    idx2d = indices.reshape(b, 1)
    return pl.pallas_call(
        _embed_onehot_kernel,
        out_shape=jax.ShapeDtypeStruct((b, d), table.dtype),
        in_specs=[
            pl.BlockSpec(memory_space=pltpu.MemorySpace.VMEM),   # indices (B, 1)
            pl.BlockSpec(memory_space=pltpu.MemorySpace.VMEM),   # full table (N, D)
        ],
        out_specs=pl.BlockSpec(memory_space=pltpu.MemorySpace.VMEM),
        cost_estimate=pl.CostEstimate(
            flops=2 * b * n_classes * d,
            transcendentals=0,
            bytes_accessed=n_classes * d * itemsize + b * d * itemsize + b * 4,
        ),
    )(idx2d, table)


# ----------------------------------------------------------------------------- #
# Large-table fallback: data-dependent per-row DMA gather (table-size independent)
# ----------------------------------------------------------------------------- #
def _embed_row_kernel(idx_ref, row_ref, out_ref):
    """Copy the one gathered embedding row into the output tile.

    idx_ref : SMEM (B,) int32 -- scalar-prefetched ids (consumed by the index_maps)
    row_ref : VMEM (1, D)     -- the requested row, DMA'd via data-dependent index_map
    out_ref : VMEM (1, D)
    """
    del idx_ref
    out_ref[...] = row_ref[...]


def _forward_large_table(indices, table):
    (b,) = indices.shape
    n_classes, d = table.shape
    itemsize = jnp.dtype(table.dtype).itemsize
    return pl.pallas_call(
        _embed_row_kernel,
        out_shape=jax.ShapeDtypeStruct((b, d), table.dtype),
        grid_spec=pltpu.PrefetchScalarGridSpec(
            num_scalar_prefetch=1,                 # indices -> SMEM
            grid=(b,),
            in_specs=[
                # Gather exactly the requested row; deeper buffering so the tiny,
                # descriptor-bound row fetches stay overlapped.
                pl.BlockSpec((1, d), lambda i, idx: (idx[i], 0),
                             pipeline_mode=pl.Buffered(4)),
            ],
            out_specs=pl.BlockSpec((1, d), lambda i, idx: (i, 0)),
        ),
        compiler_params=pltpu.CompilerParams(
            # Latency-bound copies: don't split the grid across v7x TensorCores.
            dimension_semantics=("arbitrary",)),
        cost_estimate=pl.CostEstimate(
            flops=0, transcendentals=0,
            bytes_accessed=2 * b * d * itemsize + b * 4),
    )(indices, table)


# ----------------------------------------------------------------------------- #
# Public forward (matches ClassEmbedder.forward semantics)
# ----------------------------------------------------------------------------- #
def class_embedder_forward(indices, table, *, training=False,
                           cond_drop_rate=0.1, rng=None):
    """JAX/Pallas equivalent of ClassEmbedder.forward."""
    b = indices.shape[0]
    n_classes, d = table.shape

    if cond_drop_rate > 0 and training:
        # Matches the PyTorch reference exactly: while training, ALL indices are
        # replaced with uniformly random class ids (cond_drop_rate only gates the
        # branch; it does not act as a per-sample drop probability).
        if rng is None:
            raise ValueError("training=True with cond_drop_rate > 0 requires rng")
        indices = jax.random.randint(rng, (b,), 0, n_classes, dtype=jnp.int32)

    # nn.Embedding raises on out-of-range ids; Pallas does not bounds-check, so clamp
    # defensively (documented semantic divergence, negligible cost).
    indices = jnp.clip(indices.astype(jnp.int32), 0, n_classes - 1)

    table_bytes = n_classes * d * jnp.dtype(table.dtype).itemsize
    if table_bytes <= _VMEM_TABLE_BYTES_LIMIT:
        return _forward_small_table(indices, table)
    return _forward_large_table(indices, table)


if __name__ == "__main__":
    EMBED_DIM = 32
    N_CLASSES = 1000
    BATCH = 8

    key = jax.random.PRNGKey(0)
    k_table, k_idx, k_drop = jax.random.split(key, 3)

    # nn.Embedding default init: weight ~ N(0, 1)
    table = jax.random.normal(k_table, (N_CLASSES, EMBED_DIM), dtype=jnp.float32)
    indices = jax.random.randint(k_idx, (BATCH,), 0, N_CLASSES, dtype=jnp.int32)

    # eval-mode forward (cond_drop_rate path disabled, like model.eval())
    out = class_embedder_forward(indices, table, training=False)
    out = jax.block_until_ready(out)

    ref = table[indices]
    assert out.shape == (BATCH, EMBED_DIM)
    assert out.dtype == jnp.float32
    assert jnp.allclose(out, ref, rtol=1e-5, atol=1e-6), \
        "mismatch vs reference embedding lookup"

    # training-mode path (all ids replaced with uniform random class ids)
    out_train = class_embedder_forward(indices, table, training=True,
                                       cond_drop_rate=0.1, rng=k_drop)
    out_train = jax.block_until_ready(out_train)
    assert out_train.shape == (BATCH, EMBED_DIM)
    train_ref_idx = jax.random.randint(k_drop, (BATCH,), 0, N_CLASSES,
                                       dtype=jnp.int32)
    assert jnp.allclose(out_train, table[train_ref_idx], rtol=1e-5, atol=1e-6), \
        "training-path mismatch vs reference random-class lookup"

    print("KERNEL_OK")
</pallas_src>

<mosaic_0001>
module attributes {stable_mosaic.version = 11 : i64} {
  func.func @_embed_onehot_kernel(%arg0: memref<8x1xi32, #tpu.memory_space<vmem>>, %arg1: memref<1000x32xf32, #tpu.memory_space<vmem>>, %arg2: memref<8x32xf32, #tpu.memory_space<vmem>>) attributes {dimension_semantics = [], scalar_prefetch = 0 : i64, scratch_operands = 0 : i64, tpu.core_type = #tpu.core_type<tc>} {
    %c0 = arith.constant 0 : index
    %c0_0 = arith.constant 0 : index
    %0 = vector.load %arg0[%c0, %c0_0] : memref<8x1xi32, #tpu.memory_space<vmem>>, vector<8x1xi32>
    %1 = tpu.iota {dimensions = array<i32: 1>} : vector<8x1000xi32>
    %2 = vector.broadcast %0 : vector<8x1xi32> to vector<8x1000xi32>
    %3 = arith.cmpi eq, %1, %2 : vector<8x1000xi32>
    %4 = arith.extui %3 : vector<8x1000xi1> to vector<8x1000xi32>
    %5 = arith.sitofp %4 : vector<8x1000xi32> to vector<8x1000xf32>
    %c0_1 = arith.constant 0 : index
    %c0_2 = arith.constant 0 : index
    %6 = vector.load %arg1[%c0_1, %c0_2] : memref<1000x32xf32, #tpu.memory_space<vmem>>, vector<1000x32xf32>
    %cst = arith.constant dense<0.000000e+00> : vector<8x32xf32>
    %7 = tpu.matmul %5, %6, %cst {dimension_numbers = #tpu.dot_dimension_numbers<[1], [0], [0], [1], [0, 0, 1, 1], [], []>, precision = #tpu.contract_precision<fp32>} : vector<8x1000xf32>, vector<1000x32xf32>, vector<8x32xf32> -> vector<8x32xf32>
    %c0_3 = arith.constant 0 : index
    %c0_4 = arith.constant 0 : index
    %8 = vector.load %arg2[%c0_3, %c0_4] : memref<8x32xf32, #tpu.memory_space<vmem>>, vector<8x32xf32>
    tpu.vector_store %arg2[%c0_3, %c0_4], %7 {strides = array<i32>} : memref<8x32xf32, #tpu.memory_space<vmem>>, vector<8x32xf32>,
    return
  }
}

</mosaic_0001>

<llo_original>
// kernel: tpu_custom_call.1
$region0: #{tpu_custom_call.1}
  #allocation0 [shape = 'u32[]', space=smem, size = 0x4, offset = 0x4, fixed_abs, tag = 'smem constant byte address 0x4 - core index']
  #allocation1 [shape = 'u32[72,128]{1,0:T(1,128)}', space=vmem, size = 0x9000, scoped, tag = 'internal scratch']
  %s0 = inlined_call_operand.vmem [shape: s32[8,1], index: 0, kind: input, shape index: {}]
  %s1 = inlined_call_operand.vmem [shape: f32[1000,32], index: 1, kind: input, shape index: {}]
  %s2 = inlined_call_operand.hbm [shape: f32[8,32], index: 2, kind: output, shape index: {}]
  %s3 = sld [smem:[#allocation0]]
  $region18: #{tpu_custom_call.1} parent=0
    _
  %s5 = ssub.s32 1, %s3
  %s6 = scalar_select 0, %s5, %s3
  $region1: #{tpu_custom_call.1} parent=0
    #allocation2 [shape = 'u8[4096]{0}', space=vmem, size = 0x1000, scoped, tag = 'output window, operand 0, single buffered']
    #allocation3 [shape = 's32[1]{0}', space=sflag, size = 0x4, scoped, tag = 'scoped memory for tpu_custom_call.1']
    %7 = vsyncpa [#allocation3], 0
    // Predicated region
    $region2: #{tpu_custom_call.1} parent=1 // pred_check
      _
    $region3: #{tpu_custom_call.1} parent=1 // pred_check_branch
      %9 = sbr.rel (0) target = $region5
    $region4: #{tpu_custom_call.1} parent=1 // pred_region
      _
    $region5: #{tpu_custom_call.1} parent=1 // pred_fallthru
      _
    // Predicated region
    $region6: #{tpu_custom_call.1} parent=1 // pred_check
      _
    $region7: #{tpu_custom_call.1} parent=1 // pred_check_branch
      %11 = sbr.rel (0) target = $region9
    $region8: #{tpu_custom_call.1} parent=1 // pred_region
      _
    $region9: #{tpu_custom_call.1} parent=1 // pred_fallthru
      _
    %v12 = vld [vmem:[%s0] sm:$0xff]
    %v13 = vlaneseq
    %v14 = vand.u32 %v13, 127
    %v15 = vadd.s32 %v14, 128
    %v16 = vadd.s32 %v14, 256
    %v17 = vadd.s32 %v14, 384
    %v18 = vadd.s32 %v14, 512
    %v19 = vadd.s32 %v14, 640
    %v20 = vadd.s32 %v14, 768
    %v21 = vadd.s32 %v14, 896
    %22 = vset.pattern.permute.xlu0 0
    %23 = vperm.xlu0 %22, %v12
    %v24 = vpop.permute.xlu0 %23
    %vm25 = vcmp.eq.s32.totalorder %v14, %v24
    %vm26 = vcmp.eq.s32.totalorder %v15, %v24
    %vm27 = vcmp.eq.s32.totalorder %v16, %v24
    %vm28 = vcmp.eq.s32.totalorder %v17, %v24
    %vm29 = vcmp.eq.s32.totalorder %v18, %v24
    %vm30 = vcmp.eq.s32.totalorder %v19, %v24
    %vm31 = vcmp.eq.s32.totalorder %v20, %v24
    %vm32 = vcmp.eq.s32.totalorder %v21, %v24
    %v33 = vsel %vm25, 1, 0
    %v34 = vsel %vm26, 1, 0
    %v35 = vsel %vm27, 1, 0
    %v36 = vsel %vm28, 1, 0
    %v37 = vsel %vm29, 1, 0
    %v38 = vsel %vm30, 1, 0
    %v39 = vsel %vm31, 1, 0
    %v40 = vsel %vm32, 1, 0
    %v41 = vcvt.s32.f32 %v33
    %v42 = vcvt.s32.f32 %v34
    %v43 = vcvt.s32.f32 %v35
    %v44 = vcvt.s32.f32 %v36
    %v45 = vcvt.s32.f32 %v37
    %v46 = vcvt.s32.f32 %v38
    %v47 = vcvt.s32.f32 %v39
    %v48 = vcvt.s32.f32 %v40
    %v49 = vld [vmem:[%s1] sm:$0xff]
    %v50 = vld [vmem:[%s1 + $0x8] sm:$0xff]
    %v51 = vld [vmem:[%s1 + $0x10] sm:$0xff]
    %v52 = vld [vmem:[%s1 + $0x18] sm:$0xff]
    %v53 = vld [vmem:[%s1 + $0x20] sm:$0xff]
    %v54 = vld [vmem:[%s1 + $0x28] sm:$0xff]
    %v55 = vld [vmem:[%s1 + $0x30] sm:$0xff]
    %v56 = vld [vmem:[%s1 + $0x38] sm:$0xff]
    %v57 = vld [vmem:[%s1 + $0x40] sm:$0xff]
    %v58 = vld [vmem:[%s1 + $0x48] sm:$0xff]
    %v59 = vld [vmem:[%s1 + $0x50] sm:$0xff]
    %v60 = vld [vmem:[%s1 + $0x58] sm:$0xff]
    %v61 = vld [vmem:[%s1 + $0x60] sm:$0xff]
    %v62 = vld [vmem:[%s1 + $0x68] sm:$0xff]
    %v63 = vld [vmem:[%s1 + $0x70] sm:$0xff]
    %v64 = vld [vmem:[%s1 + $0x78] sm:$0xff]
    %v65 = vld [vmem:[%s1 + $0x80] sm:$0xff]
    %v66 = vld [vmem:[%s1 + $0x88] sm:$0xff]
    %v67 = vld [vmem:[%s1 + $0x90] sm:$0xff]
    %v68 = vld [vmem:[%s1 + $0x98] sm:$0xff]
    %v69 = vld [vmem:[%s1 + $0xa0] sm:$0xff]
    %v70 = vld [vmem:[%s1 + $0xa8] sm:$0xff]
    %v71 = vld [vmem:[%s1 + $0xb0] sm:$0xff]
    %v72 = vld [vmem:[%s1 + $0xb8] sm:$0xff]
    %v73 = vld [vmem:[%s1 + $0xc0] sm:$0xff]
    %v74 = vld [vmem:[%s1 + $0xc8] sm:$0xff]
    %v75 = vld [vmem:[%s1 + $0xd0] sm:$0xff]
    %v76 = vld [vmem:[%s1 + $0xd8] sm:$0xff]
    %v77 = vld [vmem:[%s1 + $0xe0] sm:$0xff]
    %v78 = vld [vmem:[%s1 + $0xe8] sm:$0xff]
    %v79 = vld [vmem:[%s1 + $0xf0] sm:$0xff]
    %v80 = vld [vmem:[%s1 + $0xf8] sm:$0xff]
    %v81 = vld [vmem:[%s1 + $0x100] sm:$0xff]
    %v82 = vld [vmem:[%s1 + $0x108] sm:$0xff]
    %v83 = vld [vmem:[%s1 + $0x110] sm:$0xff]
    %v84 = vld [vmem:[%s1 + $0x118] sm:$0xff]
    %v85 = vld [vmem:[%s1 + $0x120] sm:$0xff]
    %v86 = vld [vmem:[%s1 + $0x128] sm:$0xff]
    %v87 = vld [vmem:[%s1 + $0x130] sm:$0xff]
    %v88 = vld [vmem:[%s1 + $0x138] sm:$0xff]
    %v89 = vld [vmem:[%s1 + $0x140] sm:$0xff]
    %v90 = vld [vmem:[%s1 + $0x148] sm:$0xff]
    %v91 = vld [vmem:[%s1 + $0x150] sm:$0xff]
    %v92 = vld [vmem:[%s1 + $0x158] sm:$0xff]
    %v93 = vld [vmem:[%s1 + $0x160] sm:$0xff]
    %v94 = vld [vmem:[%s1 + $0x168] sm:$0xff]
    %v95 = vld [vmem:[%s1 + $0x170] sm:$0xff]
    %v96 = vld [vmem:[%s1 + $0x178] sm:$0xff]
    %v97 = vld [vmem:[%s1 + $0x180] sm:$0xff]
    %v98 = vld [vmem:[%s1 + $0x188] sm:$0xff]
    %v99 = vld [vmem:[%s1 + $0x190] sm:$0xff]
    %v100 = vld [vmem:[%s1 + $0x198] sm:$0xff]
    %v101 = vld [vmem:[%s1 + $0x1a0] sm:$0xff]
    %v102 = vld [vmem:[%s1 + $0x1a8] sm:$0xff]
    %v103 = vld [vmem:[%s1 + $0x1b0] sm:$0xff]
    %v104 = vld [vmem:[%s1 + $0x1b8] sm:$0xff]
    %v105 = vld [vmem:[%s1 + $0x1c0] sm:$0xff]
    %v106 = vld [vmem:[%s1 + $0x1c8] sm:$0xff]
    %v107 = vld [vmem:[%s1 + $0x1d0] sm:$0xff]
    %v108 = vld [vmem:[%s1 + $0x1d8] sm:$0xff]
    %v109 = vld [vmem:[%s1 + $0x1e0] sm:$0xff]
    %v110 = vld [vmem:[%s1 + $0x1e8] sm:$0xff]
    %v111 = vld [vmem:[%s1 + $0x1f0] sm:$0xff]
    %v112 = vld [vmem:[%s1 + $0x1f8] sm:$0xff]
    %v113 = vld [vmem:[%s1 + $0x200] sm:$0xff]
    %v114 = vld [vmem:[%s1 + $0x208] sm:$0xff]
    %v115 = vld [vmem:[%s1 + $0x210] sm:$0xff]
    %v116 = vld [vmem:[%s1 + $0x218] sm:$0xff]
    %v117 = vld [vmem:[%s1 + $0x220] sm:$0xff]
    %v118 = vld [vmem:[%s1 + $0x228] sm:$0xff]
    %v119 = vld [vmem:[%s1 + $0x230] sm:$0xff]
    %v120 = vld [vmem:[%s1 + $0x238] sm:$0xff]
    %v121 = vld [vmem:[%s1 + $0x240] sm:$0xff]
    %v122 = vld [vmem:[%s1 + $0x248] sm:$0xff]
    %v123 = vld [vmem:[%s1 + $0x250] sm:$0xff]
    %v124 = vld [vmem:[%s1 + $0x258] sm:$0xff]
    %v125 = vld [vmem:[%s1 + $0x260] sm:$0xff]
    %v126 = vld [vmem:[%s1 + $0x268] sm:$0xff]
    %v127 = vld [vmem:[%s1 + $0x270] sm:$0xff]
    %v128 = vld [vmem:[%s1 + $0x278] sm:$0xff]
    %v129 = vld [vmem:[%s1 + $0x280] sm:$0xff]
    %v130 = vld [vmem:[%s1 + $0x288] sm:$0xff]
    %v131 = vld [vmem:[%s1 + $0x290] sm:$0xff]
    %v132 = vld [vmem:[%s1 + $0x298] sm:$0xff]
    %v133 = vld [vmem:[%s1 + $0x2a0] sm:$0xff]
    %v134 = vld [vmem:[%s1 + $0x2a8] sm:$0xff]
    %v135 = vld [vmem:[%s1 + $0x2b0] sm:$0xff]
    %v136 = vld [vmem:[%s1 + $0x2b8] sm:$0xff]
    %v137 = vld [vmem:[%s1 + $0x2c0] sm:$0xff]
    %v138 = vld [vmem:[%s1 + $0x2c8] sm:$0xff]
    %v139 = vld [vmem:[%s1 + $0x2d0] sm:$0xff]
    %v140 = vld [vmem:[%s1 + $0x2d8] sm:$0xff]
    %v141 = vld [vmem:[%s1 + $0x2e0] sm:$0xff]
    %v142 = vld [vmem:[%s1 + $0x2e8] sm:$0xff]
    %v143 = vld [vmem:[%s1 + $0x2f0] sm:$0xff]
    %v144 = vld [vmem:[%s1 + $0x2f8] sm:$0xff]
    %v145 = vld [vmem:[%s1 + $0x300] sm:$0xff]
    %v146 = vld [vmem:[%s1 + $0x308] sm:$0xff]
    %v147 = vld [vmem:[%s1 + $0x310] sm:$0xff]
    %v148 = vld [vmem:[%s1 + $0x318] sm:$0xff]
    %v149 = vld [vmem:[%s1 + $0x320] sm:$0xff]
    %v150 = vld [vmem:[%s1 + $0x328] sm:$0xff]
    %v151 = vld [vmem:[%s1 + $0x330] sm:$0xff]
    %v152 = vld [vmem:[%s1 + $0x338] sm:$0xff]
    %v153 = vld [vmem:[%s1 + $0x340] sm:$0xff]
    %v154 = vld [vmem:[%s1 + $0x348] sm:$0xff]
    %v155 = vld [vmem:[%s1 + $0x350] sm:$0xff]
    %v156 = vld [vmem:[%s1 + $0x358] sm:$0xff]
    %v157 = vld [vmem:[%s1 + $0x360] sm:$0xff]
    %v158 = vld [vmem:[%s1 + $0x368] sm:$0xff]
    %v159 = vld [vmem:[%s1 + $0x370] sm:$0xff]
    %v160 = vld [vmem:[%s1 + $0x378] sm:$0xff]
    %v161 = vld [vmem:[%s1 + $0x380] sm:$0xff]
    %v162 = vld [vmem:[%s1 + $0x388] sm:$0xff]
    %v163 = vld [vmem:[%s1 + $0x390] sm:$0xff]
    %v164 = vld [vmem:[%s1 + $0x398] sm:$0xff]
    %v165 = vld [vmem:[%s1 + $0x3a0] sm:$0xff]
    %v166 = vld [vmem:[%s1 + $0x3a8] sm:$0xff]
    %v167 = vld [vmem:[%s1 + $0x3b0] sm:$0xff]
    %v168 = vld [vmem:[%s1 + $0x3b8] sm:$0xff]
    %v169 = vld [vmem:[%s1 + $0x3c0] sm:$0xff]
    %v170 = vld [vmem:[%s1 + $0x3c8] sm:$0xff]
    %v171 = vld [vmem:[%s1 + $0x3d0] sm:$0xff]
    %v172 = vld [vmem:[%s1 + $0x3d8] sm:$0xff]
    %v173 = vld [vmem:[%s1 + $0x3e0] sm:$0xff]
    %vm174 = vcmask 850944
    %v176 = vsel %vm174, %v48, 0
    %v178 = vand.u32 %v64, 4294901760
    %179 = vmatpush.msra.mxu0 %v178
    %v180 = vand.u32 %v63, 4294901760
    %181 = vmatpush.msra.mxu0 %v180
    %v182 = vand.u32 %v62, 4294901760
    %183 = vmatpush.msra.mxu0 %v182
    %v184 = vand.u32 %v61, 4294901760
    %185 = vmatpush.msra.mxu0 %v184
    %v186 = vand.u32 %v60, 4294901760
    %187 = vmatpush.msra.mxu0 %v186
    %v188 = vand.u32 %v59, 4294901760
    %189 = vmatpush.msra.mxu0 %v188
    %v190 = vand.u32 %v58, 4294901760
    %191 = vmatpush.msra.mxu0 %v190
    %v192 = vand.u32 %v57, 4294901760
    %193 = vmatpush.msra.mxu0 %v192
    %v194 = vand.u32 %v56, 4294901760
    %195 = vmatpush.msra.mxu0 %v194
    %v196 = vand.u32 %v55, 4294901760
    %197 = vmatpush.msra.mxu0 %v196
    %v198 = vand.u32 %v54, 4294901760
    %199 = vmatpush.msra.mxu0 %v198
    %v200 = vand.u32 %v53, 4294901760
    %201 = vmatpush.msra.mxu0 %v200
    %v202 = vand.u32 %v52, 4294901760
    %203 = vmatpush.msra.mxu0 %v202
    %v204 = vand.u32 %v51, 4294901760
    %205 = vmatpush.msra.mxu0 %v204
    %v206 = vand.u32 %v50, 4294901760
    %207 = vmatpush.msra.mxu0 %v206
    %v208 = vand.u32 %v49, 4294901760
    %209 = vmatpush.msra.mxu0 %v208
    %v210 = vand.u32 %v41, 4294901760
    %v211 = vsub.f32 %v41, %v210
    %v212 = vand.u32 %v211, 4294901760
    %v213 = vsub.f32 %v211, %v212
    %v214 = vand.u32 %v213, 4294901760
    %215 = vmatmul.f32.gmra.mxu0 %v214
    %v216 = vpop.f32.mrf.mxu0
    %v217 = vadd.f32 0.0, %v216
    %218 = vdwg.mxu0
    %v219 = vand.u32 %v64, 4294901760
    %v220 = vsub.f32 %v64, %v219
    %v221 = vand.u32 %v220, 4294901760
    %v222 = vsub.f32 %v220, %v221
    %v223 = vand.u32 %v222, 4294901760
    %224 = vmatpush.msra.mxu0 %v223
    %v225 = vand.u32 %v63, 4294901760
    %v226 = vsub.f32 %v63, %v225
    %v227 = vand.u32 %v226, 4294901760
    %v228 = vsub.f32 %v226, %v227
    %v229 = vand.u32 %v228, 4294901760
    %230 = vmatpush.msra.mxu0 %v229
    %v231 = vand.u32 %v62, 4294901760
    %v232 = vsub.f32 %v62, %v231
    %v233 = vand.u32 %v232, 4294901760
    %v234 = vsub.f32 %v232, %v233
    %v235 = vand.u32 %v234, 4294901760
    %236 = vmatpush.msra.mxu0 %v235
    %v237 = vand.u32 %v61, 4294901760
    %v238 = vsub.f32 %v61, %v237
    %v239 = vand.u32 %v238, 4294901760
    %v240 = vsub.f32 %v238, %v239
    %v241 = vand.u32 %v240, 4294901760
    %242 = vmatpush.msra.mxu0 %v241
    %v243 = vand.u32 %v60, 4294901760
    %v244 = vsub.f32 %v60, %v243
    %v245 = vand.u32 %v244, 4294901760
    %v246 = vsub.f32 %v244, %v245
    %v247 = vand.u32 %v246, 4294901760
    %248 = vmatpush.msra.mxu0 %v247
    %v249 = vand.u32 %v59, 4294901760
    %v250 = vsub.f32 %v59, %v249
    %v251 = vand.u32 %v250, 4294901760
    %v252 = vsub.f32 %v250, %v251
    %v253 = vand.u32 %v252, 4294901760
    %254 = vmatpush.msra.mxu0 %v253
    %v255 = vand.u32 %v58, 4294901760
    %v256 = vsub.f32 %v58, %v255
    %v257 = vand.u32 %v256, 4294901760
    %v258 = vsub.f32 %v256, %v257
    %v259 = vand.u32 %v258, 4294901760
    %260 = vmatpush.msra.mxu0 %v259
    %v261 = vand.u32 %v57, 4294901760
    %v262 = vsub.f32 %v57, %v261
    %v263 = vand.u32 %v262, 4294901760
    %v264 = vsub.f32 %v262, %v263
    %v265 = vand.u32 %v264, 4294901760
    %266 = vmatpush.msra.mxu0 %v265
    %v267 = vand.u32 %v56, 4294901760
    %v268 = vsub.f32 %v56, %v267
    %v269 = vand.u32 %v268, 4294901760
    %v270 = vsub.f32 %v268, %v269
    %v271 = vand.u32 %v270, 4294901760
    %272 = vmatpush.msra.mxu0 %v271
    %v273 = vand.u32 %v55, 4294901760
    %v274 = vsub.f32 %v55, %v273
    %v275 = vand.u32 %v274, 4294901760
    %v276 = vsub.f32 %v274, %v275
    %v277 = vand.u32 %v276, 4294901760
    %278 = vmatpush.msra.mxu0 %v277
    %v279 = vand.u32 %v54, 4294901760
    %v280 = vsub.f32 %v54, %v279
    %v281 = vand.u32 %v280, 4294901760
    %v282 = vsub.f32 %v280, %v281
    %v283 = vand.u32 %v282, 4294901760
    %284 = vmatpush.msra.mxu0 %v283
    %v285 = vand.u32 %v53, 4294901760
    %v286 = vsub.f32 %v53, %v285
    %v287 = vand.u32 %v286, 4294901760
    %v288 = vsub.f32 %v286, %v287
    %v289 = vand.u32 %v288, 4294901760
    %290 = vmatpush.msra.mxu0 %v289
    %v291 = vand.u32 %v52, 4294901760
    %v292 = vsub.f32 %v52, %v291
    %v293 = vand.u32 %v292, 4294901760
    %v294 = vsub.f32 %v292, %v293
    %v295 = vand.u32 %v294, 4294901760
    %296 = vmatpush.msra.mxu0 %v295
    %v297 = vand.u32 %v51, 4294901760
    %v298 = vsub.f32 %v51, %v297
    %v299 = vand.u32 %v298, 4294901760
    %v300 = vsub.f32 %v298, %v299
    %v301 = vand.u32 %v300, 4294901760
    %302 = vmatpush.msra.mxu0 %v301
    %v303 = vand.u32 %v50, 4294901760
    %v304 = vsub.f32 %v50, %v303
    %v305 = vand.u32 %v304, 4294901760
    %v306 = vsub.f32 %v304, %v305
    %v307 = vand.u32 %v306, 4294901760
    %308 = vmatpush.msra.mxu0 %v307
    %v309 = vand.u32 %v49, 4294901760
    %v310 = vsub.f32 %v49, %v309
    %v311 = vand.u32 %v310, 4294901760
    %v312 = vsub.f32 %v310, %v311
    %v313 = vand.u32 %v312, 4294901760
    %314 = vmatpush.msra.mxu0 %v313
    %v315 = vand.u32 %v41, 4294901760
    %316 = vmatmul.f32.gmra.mxu0 %v315
    %v317 = vpop.f32.mrf.mxu0
    %v318 = vadd.f32 %v217, %v317
    %319 = vdwg.mxu0
    %v320 = vand.u32 %v64, 4294901760
    %v321 = vsub.f32 %v64, %v320
    %322 = vmatpush.msra.mxu0 %v321
    %v323 = vand.u32 %v63, 4294901760
    %v324 = vsub.f32 %v63, %v323
    %325 = vmatpush.msra.mxu0 %v324
    %v326 = vand.u32 %v62, 4294901760
    %v327 = vsub.f32 %v62, %v326
    %328 = vmatpush.msra.mxu0 %v327
    %v329 = vand.u32 %v61, 4294901760
    %v330 = vsub.f32 %v61, %v329
    %331 = vmatpush.msra.mxu0 %v330
    %v332 = vand.u32 %v60, 4294901760
    %v333 = vsub.f32 %v60, %v332
    %334 = vmatpush.msra.mxu0 %v333
    %v335 = vand.u32 %v59, 4294901760
    %v336 = vsub.f32 %v59, %v335
    %337 = vmatpush.msra.mxu0 %v336
    %v338 = vand.u32 %v58, 4294901760
    %v339 = vsub.f32 %v58, %v338
    %340 = vmatpush.msra.mxu0 %v339
    %v341 = vand.u32 %v57, 4294901760
    %v342 = vsub.f32 %v57, %v341
    %343 = vmatpush.msra.mxu0 %v342
    %v344 = vand.u32 %v56, 4294901760
    %v345 = vsub.f32 %v56, %v344
    %346 = vmatpush.msra.mxu0 %v345
    %v347 = vand.u32 %v55, 4294901760
    %v348 = vsub.f32 %v55, %v347
    %349 = vmatpush.msra.mxu0 %v348
    %v350 = vand.u32 %v54, 4294901760
    %v351 = vsub.f32 %v54, %v350
    %352 = vmatpush.msra.mxu0 %v351
    %v353 = vand.u32 %v53, 4294901760
    %v354 = vsub.f32 %v53, %v353
    %355 = vmatpush.msra.mxu0 %v354
    %v356 = vand.u32 %v52, 4294901760
    %v357 = vsub.f32 %v52, %v356
    %358 = vmatpush.msra.mxu0 %v357
    %v359 = vand.u32 %v51, 4294901760
    %v360 = vsub.f32 %v51, %v359
    %361 = vmatpush.msra.mxu0 %v360
    %v362 = vand.u32 %v50, 4294901760
    %v363 = vsub.f32 %v50, %v362
    %364 = vmatpush.msra.mxu0 %v363
    %v365 = vand.u32 %v49, 4294901760
    %v366 = vsub.f32 %v49, %v365
    %367 = vmatpush.msra.mxu0 %v366
    %v368 = vand.u32 %v41, 4294901760
    %v369 = vsub.f32 %v41, %v368
    %370 = vmatmul.f32.gmra.mxu0 %v369
    %v371 = vpop.f32.mrf.mxu0
    %v372 = vadd.f32 %v318, %v371
    %373 = vdwg.mxu0
    %v374 = vand.u32 %v64, 4294901760
    %375 = vmatpush.msra.mxu0 %v374
    %v376 = vand.u32 %v63, 4294901760
    %377 = vmatpush.msra.mxu0 %v376
    %v378 = vand.u32 %v62, 4294901760
    %379 = vmatpush.msra.mxu0 %v378
    %v380 = vand.u32 %v61, 4294901760
    %381 = vmatpush.msra.mxu0 %v380
    %v382 = vand.u32 %v60, 4294901760
    %383 = vmatpush.msra.mxu0 %v382
    %v384 = vand.u32 %v59, 4294901760
    %385 = vmatpush.msra.mxu0 %v384
    %v386 = vand.u32 %v58, 4294901760
    %387 = vmatpush.msra.mxu0 %v386
    %v388 = vand.u32 %v57, 4294901760
    %389 = vmatpush.msra.mxu0 %v388
    %v390 = vand.u32 %v56, 4294901760
    %391 = vmatpush.msra.mxu0 %v390
    %v392 = vand.u32 %v55, 4294901760
    %393 = vmatpush.msra.mxu0 %v392
    %v394 = vand.u32 %v54, 4294901760
    %395 = vmatpush.msra.mxu0 %v394
    %v396 = vand.u32 %v53, 4294901760
    %397 = vmatpush.msra.mxu0 %v396
    %v398 = vand.u32 %v52, 4294901760
    %399 = vmatpush.msra.mxu0 %v398
    %v400 = vand.u32 %v51, 4294901760
    %401 = vmatpush.msra.mxu0 %v400
    %v402 = vand.u32 %v50, 4294901760
    %403 = vmatpush.msra.mxu0 %v402
    %v404 = vand.u32 %v49, 4294901760
    %405 = vmatpush.msra.mxu0 %v404
    %v406 = vand.u32 %v41, 4294901760
    %v407 = vsub.f32 %v41, %v406
    %v408 = vand.u32 %v407, 4294901760
    %409 = vmatmul.f32.gmra.mxu0 %v408
    %v410 = vpop.f32.mrf.mxu0
    %v411 = vadd.f32 %v372, %v410
    %412 = vdwg.mxu0
    %v413 = vand.u32 %v64, 4294901760
    %v414 = vsub.f32 %v64, %v413
    %v415 = vand.u32 %v414, 4294901760
    %416 = vmatpush.msra.mxu0 %v415
    %v417 = vand.u32 %v63, 4294901760
    %v418 = vsub.f32 %v63, %v417
    %v419 = vand.u32 %v418, 4294901760
    %420 = vmatpush.msra.mxu0 %v419
    %v421 = vand.u32 %v62, 4294901760
    %v422 = vsub.f32 %v62, %v421
    %v423 = vand.u32 %v422, 4294901760
    %424 = vmatpush.msra.mxu0 %v423
    %v425 = vand.u32 %v61, 4294901760
    %v426 = vsub.f32 %v61, %v425
    %v427 = vand.u32 %v426, 4294901760
    %428 = vmatpush.msra.mxu0 %v427
    %v429 = vand.u32 %v60, 4294901760
    %v430 = vsub.f32 %v60, %v429
    %v431 = vand.u32 %v430, 4294901760
    %432 = vmatpush.msra.mxu0 %v431
    %v433 = vand.u32 %v59, 4294901760
    %v434 = vsub.f32 %v59, %v433
    %v435 = vand.u32 %v434, 4294901760
    %436 = vmatpush.msra.mxu0 %v435
    %v437 = vand.u32 %v58, 4294901760
    %v438 = vsub.f32 %v58, %v437
    %v439 = vand.u32 %v438, 4294901760
    %440 = vmatpush.msra.mxu0 %v439
    %v441 = vand.u32 %v57, 4294901760
    %v442 = vsub.f32 %v57, %v441
    %v443 = vand.u32 %v442, 4294901760
    %444 = vmatpush.msra.mxu0 %v443
    %v445 = vand.u32 %v56, 4294901760
    %v446 = vsub.f32 %v56, %v445
    %v447 = vand.u32 %v446, 4294901760
    %448 = vmatpush.msra.mxu0 %v447
    %v449 = vand.u32 %v55, 4294901760
    %v450 = vsub.f32 %v55, %v449
    %v451 = vand.u32 %v450, 4294901760
    %452 = vmatpush.msra.mxu0 %v451
    %v453 = vand.u32 %v54, 4294901760
    %v454 = vsub.f32 %v54, %v453
    %v455 = vand.u32 %v454, 4294901760
    %456 = vmatpush.msra.mxu0 %v455
    %v457 = vand.u32 %v53, 4294901760
    %v458 = vsub.f32 %v53, %v457
    %v459 = vand.u32 %v458, 4294901760
    %460 = vmatpush.msra.mxu0 %v459
    %v461 = vand.u32 %v52, 4294901760
    %v462 = vsub.f32 %v52, %v461
    %v463 = vand.u32 %v462, 4294901760
    %464 = vmatpush.msra.mxu0 %v463
    %v465 = vand.u32 %v51, 4294901760
    %v466 = vsub.f32 %v51, %v465
    %v467 = vand.u32 %v466, 4294901760
    %468 = vmatpush.msra.mxu0 %v467
    %v469 = vand.u32 %v50, 4294901760
    %v470 = vsub.f32 %v50, %v469
    %v471 = vand.u32 %v470, 4294901760
    %472 = vmatpush.msra.mxu0 %v471
    %v473 = vand.u32 %v49, 4294901760
    %v474 = vsub.f32 %v49, %v473
    %v475 = vand.u32 %v474, 4294901760
    %476 = vmatpush.msra.mxu0 %v475
    %v477 = vand.u32 %v41, 4294901760
    %478 = vmatmul.f32.gmra.mxu0 %v477
    %v479 = vpop.f32.mrf.mxu0
    %v480 = vadd.f32 %v411, %v479
    %481 = vdwg.mxu0
    %v482 = vand.u32 %v64, 4294901760
    %483 = vmatpush.msra.mxu0 %v482
    %v484 = vand.u32 %v63, 4294901760
    %485 = vmatpush.msra.mxu0 %v484
    %v486 = vand.u32 %v62, 4294901760
    %487 = vmatpush.msra.mxu0 %v486
    %v488 = vand.u32 %v61, 4294901760
    %489 = vmatpush.msra.mxu0 %v488
    %v490 = vand.u32 %v60, 4294901760
    %491 = vmatpush.msra.mxu0 %v490
    %v492 = vand.u32 %v59, 4294901760
    %493 = vmatpush.msra.mxu0 %v492
    %v494 = vand.u32 %v58, 4294901760
    %495 = vmatpush.msra.mxu0 %v494
    %v496 = vand.u32 %v57, 4294901760
    %497 = vmatpush.msra.mxu0 %v496
    %v498 = vand.u32 %v56, 4294901760
    %499 = vmatpush.msra.mxu0 %v498
    %v500 = vand.u32 %v55, 4294901760
    %501 = vmatpush.msra.mxu0 %v500
    %v502 = vand.u32 %v54, 4294901760
    %503 = vmatpush.msra.mxu0 %v502
    %v504 = vand.u32 %v53, 4294901760
    %505 = vmatpush.msra.mxu0 %v504
    %v506 = vand.u32 %v52, 4294901760
    %507 = vmatpush.msra.mxu0 %v506
    %v508 = vand.u32 %v51, 4294901760
    %509 = vmatpush.msra.mxu0 %v508
    %v510 = vand.u32 %v50, 4294901760
    %511 = vmatpush.msra.mxu0 %v510
    %v512 = vand.u32 %v49, 4294901760
    %513 = vmatpush.msra.mxu0 %v512
    %v514 = vand.u32 %v41, 4294901760
    %515 = vmatmul.f32.gmra.mxu0 %v514
    %v516 = vpop.f32.mrf.mxu0
    %v517 = vadd.f32 %v480, %v516
    %518 = vdwg.mxu0
    %v519 = vand.u32 %v80, 4294901760
    %520 = vmatpush.msra.mxu0 %v519
    %v521 = vand.u32 %v79, 4294901760
    %522 = vmatpush.msra.mxu0 %v521
    %v523 = vand.u32 %v78, 4294901760
    %524 = vmatpush.msra.mxu0 %v523
    %v525 = vand.u32 %v77, 4294901760
    %526 = vmatpush.msra.mxu0 %v525
    %v527 = vand.u32 %v76, 4294901760
    %528 = vmatpush.msra.mxu0 %v527
    %v529 = vand.u32 %v75, 4294901760
    %530 = vmatpush.msra.mxu0 %v529
    %v531 = vand.u32 %v74, 4294901760
    %532 = vmatpush.msra.mxu0 %v531
    %v533 = vand.u32 %v73, 4294901760
    %534 = vmatpush.msra.mxu0 %v533
    %v535 = vand.u32 %v72, 4294901760
    %536 = vmatpush.msra.mxu0 %v535
    %v537 = vand.u32 %v71, 4294901760
    %538 = vmatpush.msra.mxu0 %v537
    %v539 = vand.u32 %v70, 4294901760
    %540 = vmatpush.msra.mxu0 %v539
    %v541 = vand.u32 %v69, 4294901760
    %542 = vmatpush.msra.mxu0 %v541
    %v543 = vand.u32 %v68, 4294901760
    %544 = vmatpush.msra.mxu0 %v543
    %v545 = vand.u32 %v67, 4294901760
    %546 = vmatpush.msra.mxu0 %v545
    %v547 = vand.u32 %v66, 4294901760
    %548 = vmatpush.msra.mxu0 %v547
    %v549 = vand.u32 %v65, 4294901760
    %550 = vmatpush.msra.mxu0 %v549
    %v551 = vand.u32 %v42, 4294901760
    %v552 = vsub.f32 %v42, %v551
    %v553 = vand.u32 %v552, 4294901760
    %v554 = vsub.f32 %v552, %v553
    %v555 = vand.u32 %v554, 4294901760
    %556 = vmatmul.f32.gmra.mxu0 %v555
    %v557 = vpop.f32.mrf.mxu0
    %v558 = vadd.f32 %v517, %v557
    %559 = vdwg.mxu0
    %v560 = vand.u32 %v80, 4294901760
    %v561 = vsub.f32 %v80, %v560
    %v562 = vand.u32 %v561, 4294901760
    %v563 = vsub.f32 %v561, %v562
    %v564 = vand.u32 %v563, 4294901760
    %565 = vmatpush.msra.mxu0 %v564
    %v566 = vand.u32 %v79, 4294901760
    %v567 = vsub.f32 %v79, %v566
    %v568 = vand.u32 %v567, 4294901760
    %v569 = vsub.f32 %v567, %v568
    %v570 = vand.u32 %v569, 4294901760
    %571 = vmatpush.msra.mxu0 %v570
    %v572 = vand.u32 %v78, 4294901760
    %v573 = vsub.f32 %v78, %v572
    %v574 = vand.u32 %v573, 4294901760
    %v575 = vsub.f32 %v573, %v574
    %v576 = vand.u32 %v575, 4294901760
    %577 = vmatpush.msra.mxu0 %v576
    %v578 = vand.u32 %v77, 4294901760
    %v579 = vsub.f32 %v77, %v578
    %v580 = vand.u32 %v579, 4294901760
    %v581 = vsub.f32 %v579, %v580
    %v582 = vand.u32 %v581, 4294901760
    %583 = vmatpush.msra.mxu0 %v582
    %v584 = vand.u32 %v76, 4294901760
    %v585 = vsub.f32 %v76, %v584
    %v586 = vand.u32 %v585, 4294901760
    %v587 = vsub.f32 %v585, %v586
    %v588 = vand.u32 %v587, 4294901760
    %589 = vmatpush.msra.mxu0 %v588
    %v590 = vand.u32 %v75, 4294901760
    %v591 = vsub.f32 %v75, %v590
    %v592 = vand.u32 %v591, 4294901760
    %v593 = vsub.f32 %v591, %v592
    %v594 = vand.u32 %v593, 4294901760
    %595 = vmatpush.msra.mxu0 %v594
    %v596 = vand.u32 %v74, 4294901760
    %v597 = vsub.f32 %v74, %v596
    %v598 = vand.u32 %v597, 4294901760
    %v599 = vsub.f32 %v597, %v598
    %v600 = vand.u32 %v599, 4294901760
    %601 = vmatpush.msra.mxu0 %v600
    %v602 = vand.u32 %v73, 4294901760
    %v603 = vsub.f32 %v73, %v602
    %v604 = vand.u32 %v603, 4294901760
    %v605 = vsub.f32 %v603, %v604
    %v606 = vand.u32 %v605, 4294901760
    %607 = vmatpush.msra.mxu0 %v606
    %v608 = vand.u32 %v72, 4294901760
    %v609 = vsub.f32 %v72, %v608
    %v610 = vand.u32 %v609, 4294901760
    %v611 = vsub.f32 %v609, %v610
    %v612 = vand.u32 %v611, 4294901760
    %613 = vmatpush.msra.mxu0 %v612
    %v614 = vand.u32 %v71, 4294901760
    %v615 = vsub.f32 %v71, %v614
    %v616 = vand.u32 %v615, 4294901760
    %v617 = vsub.f32 %v615, %v616
    %v618 = vand.u32 %v617, 4294901760
    %619 = vmatpush.msra.mxu0 %v618
    %v620 = vand.u32 %v70, 4294901760
    %v621 = vsub.f32 %v70, %v620
    %v622 = vand.u32 %v621, 4294901760
    %v623 = vsub.f32 %v621, %v622
    %v624 = vand.u32 %v623, 4294901760
    %625 = vmatpush.msra.mxu0 %v624
    %v626 = vand.u32 %v69, 4294901760
    %v627 = vsub.f32 %v69, %v626
    %v628 = vand.u32 %v627, 4294901760
    %v629 = vsub.f32 %v627, %v628
    %v630 = vand.u32 %v629, 4294901760
    %631 = vmatpush.msra.mxu0 %v630
    %v632 = vand.u32 %v68, 4294901760
    %v633 = vsub.f32 %v68, %v632
    %v634 = vand.u32 %v633, 4294901760
    %v635 = vsub.f32 %v633, %v634
    %v636 = vand.u32 %v635, 4294901760
    %637 = vmatpush.msra.mxu0 %v636
    %v638 = vand.u32 %v67, 4294901760
    %v639 = vsub.f32 %v67, %v638
    %v640 = vand.u32 %v639, 4294901760
    %v641 = vsub.f32 %v639, %v640
    %v642 = vand.u32 %v641, 4294901760
    %643 = vmatpush.msra.mxu0 %v642
    %v644 = vand.u32 %v66, 4294901760
    %v645 = vsub.f32 %v66, %v644
    %v646 = vand.u32 %v645, 4294901760
    %v647 = vsub.f32 %v645, %v646
    %v648 = vand.u32 %v647, 4294901760
    %649 = vmatpush.msra.mxu0 %v648
    %v650 = vand.u32 %v65, 4294901760
    %v651 = vsub.f32 %v65, %v650
    %v652 = vand.u32 %v651, 4294901760
    %v653 = vsub.f32 %v651, %v652
    %v654 = vand.u32 %v653, 4294901760
    %655 = vmatpush.msra.mxu0 %v654
    %v656 = vand.u32 %v42, 4294901760
    %657 = vmatmul.f32.gmra.mxu0 %v656
    %v658 = vpop.f32.mrf.mxu0
    %v659 = vadd.f32 %v558, %v658
    %660 = vdwg.mxu0
    %v661 = vand.u32 %v80, 4294901760
    %v662 = vsub.f32 %v80, %v661
    %663 = vmatpush.msra.mxu0 %v662
    %v664 = vand.u32 %v79, 4294901760
    %v665 = vsub.f32 %v79, %v664
    %666 = vmatpush.msra.mxu0 %v665
    %v667 = vand.u32 %v78, 4294901760
    %v668 = vsub.f32 %v78, %v667
    %669 = vmatpush.msra.mxu0 %v668
    %v670 = vand.u32 %v77, 4294901760
    %v671 = vsub.f32 %v77, %v670
    %672 = vmatpush.msra.mxu0 %v671
    %v673 = vand.u32 %v76, 4294901760
    %v674 = vsub.f32 %v76, %v673
    %675 = vmatpush.msra.mxu0 %v674
    %v676 = vand.u32 %v75, 4294901760
    %v677 = vsub.f32 %v75, %v676
    %678 = vmatpush.msra.mxu0 %v677
    %v679 = vand.u32 %v74, 4294901760
    %v680 = vsub.f32 %v74, %v679
    %681 = vmatpush.msra.mxu0 %v680
    %v682 = vand.u32 %v73, 4294901760
    %v683 = vsub.f32 %v73, %v682
    %684 = vmatpush.msra.mxu0 %v683
    %v685 = vand.u32 %v72, 4294901760
    %v686 = vsub.f32 %v72, %v685
    %687 = vmatpush.msra.mxu0 %v686
    %v688 = vand.u32 %v71, 4294901760
    %v689 = vsub.f32 %v71, %v688
    %690 = vmatpush.msra.mxu0 %v689
    %v691 = vand.u32 %v70, 4294901760
    %v692 = vsub.f32 %v70, %v691
    %693 = vmatpush.msra.mxu0 %v692
    %v694 = vand.u32 %v69, 4294901760
    %v695 = vsub.f32 %v69, %v694
    %696 = vmatpush.msra.mxu0 %v695
    %v697 = vand.u32 %v68, 4294901760
    %v698 = vsub.f32 %v68, %v697
    %699 = vmatpush.msra.mxu0 %v698
    %v700 = vand.u32 %v67, 4294901760
    %v701 = vsub.f32 %v67, %v700
    %702 = vmatpush.msra.mxu0 %v701
    %v703 = vand.u32 %v66, 4294901760
    %v704 = vsub.f32 %v66, %v703
    %705 = vmatpush.msra.mxu0 %v704
    %v706 = vand.u32 %v65, 4294901760
    %v707 = vsub.f32 %v65, %v706
    %708 = vmatpush.msra.mxu0 %v707
    %v709 = vand.u32 %v42, 4294901760
    %v710 = vsub.f32 %v42, %v709
    %711 = vmatmul.f32.gmra.mxu0 %v710
    %v712 = vpop.f32.mrf.mxu0
    %v713 = vadd.f32 %v659, %v712
    %714 = vdwg.mxu0
    %v715 = vand.u32 %v80, 4294901760
    %716 = vmatpush.msra.mxu0 %v715
    %v717 = vand.u32 %v79, 4294901760
    %718 = vmatpush.msra.mxu0 %v717
    %v719 = vand.u32 %v78, 4294901760
    %720 = vmatpush.msra.mxu0 %v719
    %v721 = vand.u32 %v77, 4294901760
    %722 = vmatpush.msra.mxu0 %v721
    %v723 = vand.u32 %v76, 4294901760
    %724 = vmatpush.msra.mxu0 %v723
    %v725 = vand.u32 %v75, 4294901760
    %726 = vmatpush.msra.mxu0 %v725
    %v727 = vand.u32 %v74, 4294901760
    %728 = vmatpush.msra.mxu0 %v727
    %v729 = vand.u32 %v73, 4294901760
    %730 = vmatpush.msra.mxu0 %v729
    %v731 = vand.u32 %v72, 4294901760
    %732 = vmatpush.msra.mxu0 %v731
    %v733 = vand.u32 %v71, 4294901760
    %734 = vmatpush.msra.mxu0 %v733
    %v735 = vand.u32 %v70, 4294901760
    %736 = vmatpush.msra.mxu0 %v735
    %v737 = vand.u32 %v69, 4294901760
    %738 = vmatpush.msra.mxu0 %v737
    %v739 = vand.u32 %v68, 4294901760
    %740 = vmatpush.msra.mxu0 %v739
    %v741 = vand.u32 %v67, 4294901760
    %742 = vmatpush.msra.mxu0 %v741
    %v743 = vand.u32 %v66, 4294901760
    %744 = vmatpush.msra.mxu0 %v743
    %v745 = vand.u32 %v65, 4294901760
    %746 = vmatpush.msra.mxu0 %v745
    %v747 = vand.u32 %v42, 4294901760
    %v748 = vsub.f32 %v42, %v747
    %v749 = vand.u32 %v748, 4294901760
    %750 = vmatmul.f32.gmra.mxu0 %v749
    %v751 = vpop.f32.mrf.mxu0
    %v752 = vadd.f32 %v713, %v751
    %753 = vdwg.mxu0
    %v754 = vand.u32 %v80, 4294901760
    %v755 = vsub.f32 %v80, %v754
    %v756 = vand.u32 %v755, 4294901760
    %757 = vmatpush.msra.mxu0 %v756
    %v758 = vand.u32 %v79, 4294901760
    %v759 = vsub.f32 %v79, %v758
    %v760 = vand.u32 %v759, 4294901760
    %761 = vmatpush.msra.mxu0 %v760
    %v762 = vand.u32 %v78, 4294901760
    %v763 = vsub.f32 %v78, %v762
    %v764 = vand.u32 %v763, 4294901760
    %765 = vmatpush.msra.mxu0 %v764
    %v766 = vand.u32 %v77, 4294901760
    %v767 = vsub.f32 %v77, %v766
    %v768 = vand.u32 %v767, 4294901760
    %769 = vmatpush.msra.mxu0 %v768
    %v770 = vand.u32 %v76, 4294901760
    %v771 = vsub.f32 %v76, %v770
    %v772 = vand.u32 %v771, 4294901760
    %773 = vmatpush.msra.mxu0 %v772
    %v774 = vand.u32 %v75, 4294901760
    %v775 = vsub.f32 %v75, %v774
    %v776 = vand.u32 %v775, 4294901760
    %777 = vmatpush.msra.mxu0 %v776
    %v778 = vand.u32 %v74, 4294901760
    %v779 = vsub.f32 %v74, %v778
    %v780 = vand.u32 %v779, 4294901760
    %781 = vmatpush.msra.mxu0 %v780
    %v782 = vand.u32 %v73, 4294901760
    %v783 = vsub.f32 %v73, %v782
    %v784 = vand.u32 %v783, 4294901760
    %785 = vmatpush.msra.mxu0 %v784
    %v786 = vand.u32 %v72, 4294901760
    %v787 = vsub.f32 %v72, %v786
    %v788 = vand.u32 %v787, 4294901760
    %789 = vmatpush.msra.mxu0 %v788
    %v790 = vand.u32 %v71, 4294901760
    %v791 = vsub.f32 %v71, %v790
    %v792 = vand.u32 %v791, 4294901760
    %793 = vmatpush.msra.mxu0 %v792
    %v794 = vand.u32 %v70, 4294901760
    %v795 = vsub.f32 %v70, %v794
    %v796 = vand.u32 %v795, 4294901760
    %797 = vmatpush.msra.mxu0 %v796
    %v798 = vand.u32 %v69, 4294901760
    %v799 = vsub.f32 %v69, %v798
    %v800 = vand.u32 %v799, 4294901760
    %801 = vmatpush.msra.mxu0 %v800
    %v802 = vand.u32 %v68, 4294901760
    %v803 = vsub.f32 %v68, %v802
    %v804 = vand.u32 %v803, 4294901760
    %805 = vmatpush.msra.mxu0 %v804
    %v806 = vand.u32 %v67, 4294901760
    %v807 = vsub.f32 %v67, %v806
    %v808 = vand.u32 %v807, 4294901760
    %809 = vmatpush.msra.mxu0 %v808
    %v810 = vand.u32 %v66, 4294901760
    %v811 = vsub.f32 %v66, %v810
    %v812 = vand.u32 %v811, 4294901760
    %813 = vmatpush.msra.mxu0 %v812
    %v814 = vand.u32 %v65, 4294901760
    %v815 = vsub.f32 %v65, %v814
    %v816 = vand.u32 %v815, 4294901760
    %817 = vmatpush.msra.mxu0 %v816
    %v818 = vand.u32 %v42, 4294901760
    %819 = vmatmul.f32.gmra.mxu0 %v818
    %v820 = vpop.f32.mrf.mxu0
    %v821 = vadd.f32 %v752, %v820
    %822 = vdwg.mxu0
    %v823 = vand.u32 %v80, 4294901760
    %824 = vmatpush.msra.mxu0 %v823
    %v825 = vand.u32 %v79, 4294901760
    %826 = vmatpush.msra.mxu0 %v825
    %v827 = vand.u32 %v78, 4294901760
    %828 = vmatpush.msra.mxu0 %v827
    %v829 = vand.u32 %v77, 4294901760
    %830 = vmatpush.msra.mxu0 %v829
    %v831 = vand.u32 %v76, 4294901760
    %832 = vmatpush.msra.mxu0 %v831
    %v833 = vand.u32 %v75, 4294901760
    %834 = vmatpush.msra.mxu0 %v833
    %v835 = vand.u32 %v74, 4294901760
    %836 = vmatpush.msra.mxu0 %v835
    %v837 = vand.u32 %v73, 4294901760
    %838 = vmatpush.msra.mxu0 %v837
    %v839 = vand.u32 %v72, 4294901760
    %840 = vmatpush.msra.mxu0 %v839
    %v841 = vand.u32 %v71, 4294901760
    %842 = vmatpush.msra.mxu0 %v841
    %v843 = vand.u32 %v70, 4294901760
    %844 = vmatpush.msra.mxu0 %v843
    %v845 = vand.u32 %v69, 4294901760
    %846 = vmatpush.msra.mxu0 %v845
    %v847 = vand.u32 %v68, 4294901760
    %848 = vmatpush.msra.mxu0 %v847
    %v849 = vand.u32 %v67, 4294901760
    %850 = vmatpush.msra.mxu0 %v849
    %v851 = vand.u32 %v66, 4294901760
    %852 = vmatpush.msra.mxu0 %v851
    %v853 = vand.u32 %v65, 4294901760
    %854 = vmatpush.msra.mxu0 %v853
    %v855 = vand.u32 %v42, 4294901760
    %856 = vmatmul.f32.gmra.mxu0 %v855
    %v857 = vpop.f32.mrf.mxu0
    %v858 = vadd.f32 %v821, %v857
    %859 = vdwg.mxu0
    %v860 = vand.u32 %v96, 4294901760
    %861 = vmatpush.msra.mxu0 %v860
    %v862 = vand.u32 %v95, 4294901760
    %863 = vmatpush.msra.mxu0 %v862
    %v864 = vand.u32 %v94, 4294901760
    %865 = vmatpush.msra.mxu0 %v864
    %v866 = vand.u32 %v93, 4294901760
    %867 = vmatpush.msra.mxu0 %v866
    %v868 = vand.u32 %v92, 4294901760
    %869 = vmatpush.msra.mxu0 %v868
    %v870 = vand.u32 %v91, 4294901760
    %871 = vmatpush.msra.mxu0 %v870
    %v872 = vand.u32 %v90, 4294901760
    %873 = vmatpush.msra.mxu0 %v872
    %v874 = vand.u32 %v89, 4294901760
    %875 = vmatpush.msra.mxu0 %v874
    %v876 = vand.u32 %v88, 4294901760
    %877 = vmatpush.msra.mxu0 %v876
    %v878 = vand.u32 %v87, 4294901760
    %879 = vmatpush.msra.mxu0 %v878
    %v880 = vand.u32 %v86, 4294901760
    %881 = vmatpush.msra.mxu0 %v880
    %v882 = vand.u32 %v85, 4294901760
    %883 = vmatpush.msra.mxu0 %v882
    %v884 = vand.u32 %v84, 4294901760
    %885 = vmatpush.msra.mxu0 %v884
    %v886 = vand.u32 %v83, 4294901760
    %887 = vmatpush.msra.mxu0 %v886
    %v888 = vand.u32 %v82, 4294901760
    %889 = vmatpush.msra.mxu0 %v888
    %v890 = vand.u32 %v81, 4294901760
    %891 = vmatpush.msra.mxu0 %v890
    %v892 = vand.u32 %v43, 4294901760
    %v893 = vsub.f32 %v43, %v892
    %v894 = vand.u32 %v893, 4294901760
    %v895 = vsub.f32 %v893, %v894
    %v896 = vand.u32 %v895, 4294901760
    %897 = vmatmul.f32.gmra.mxu0 %v896
    %v898 = vpop.f32.mrf.mxu0
    %v899 = vadd.f32 %v858, %v898
    %900 = vdwg.mxu0
    %v901 = vand.u32 %v96, 4294901760
    %v902 = vsub.f32 %v96, %v901
    %v903 = vand.u32 %v902, 4294901760
    %v904 = vsub.f32 %v902, %v903
    %v905 = vand.u32 %v904, 4294901760
    %906 = vmatpush.msra.mxu0 %v905
    %v907 = vand.u32 %v95, 4294901760
    %v908 = vsub.f32 %v95, %v907
    %v909 = vand.u32 %v908, 4294901760
    %v910 = vsub.f32 %v908, %v909
    %v911 = vand.u32 %v910, 4294901760
    %912 = vmatpush.msra.mxu0 %v911
    %v913 = vand.u32 %v94, 4294901760
    %v914 = vsub.f32 %v94, %v913
    %v915 = vand.u32 %v914, 4294901760
    %v916 = vsub.f32 %v914, %v915
    %v917 = vand.u32 %v916, 4294901760
    %918 = vmatpush.msra.mxu0 %v917
    %v919 = vand.u32 %v93, 4294901760
    %v920 = vsub.f32 %v93, %v919
    %v921 = vand.u32 %v920, 4294901760
    %v922 = vsub.f32 %v920, %v921
    %v923 = vand.u32 %v922, 4294901760
    %924 = vmatpush.msra.mxu0 %v923
    %v925 = vand.u32 %v92, 4294901760
    %v926 = vsub.f32 %v92, %v925
    %v927 = vand.u32 %v926, 4294901760
    %v928 = vsub.f32 %v926, %v927
    %v929 = vand.u32 %v928, 4294901760
    %930 = vmatpush.msra.mxu0 %v929
    %v931 = vand.u32 %v91, 4294901760
    %v932 = vsub.f32 %v91, %v931
    %v933 = vand.u32 %v932, 4294901760
    %v934 = vsub.f32 %v932, %v933
    %v935 = vand.u32 %v934, 4294901760
    %936 = vmatpush.msra.mxu0 %v935
    %v937 = vand.u32 %v90, 4294901760
    %v938 = vsub.f32 %v90, %v937
    %v939 = vand.u32 %v938, 4294901760
    %v940 = vsub.f32 %v938, %v939
    %v941 = vand.u32 %v940, 4294901760
    %942 = vmatpush.msra.mxu0 %v941
    %v943 = vand.u32 %v89, 4294901760
    %v944 = vsub.f32 %v89, %v943
    %v945 = vand.u32 %v944, 4294901760
    %v946 = vsub.f32 %v944, %v945
    %v947 = vand.u32 %v946, 4294901760
    %948 = vmatpush.msra.mxu0 %v947
    %v949 = vand.u32 %v88, 4294901760
    %v950 = vsub.f32 %v88, %v949
    %v951 = vand.u32 %v950, 4294901760
    %v952 = vsub.f32 %v950, %v951
    %v953 = vand.u32 %v952, 4294901760
    %954 = vmatpush.msra.mxu0 %v953
    %v955 = vand.u32 %v87, 4294901760
    %v956 = vsub.f32 %v87, %v955
    %v957 = vand.u32 %v956, 4294901760
    %v958 = vsub.f32 %v956, %v957
    %v959 = vand.u32 %v958, 4294901760
    %960 = vmatpush.msra.mxu0 %v959
    %v961 = vand.u32 %v86, 4294901760
    %v962 = vsub.f32 %v86, %v961
    %v963 = vand.u32 %v962, 4294901760
    %v964 = vsub.f32 %v962, %v963
    %v965 = vand.u32 %v964, 4294901760
    %966 = vmatpush.msra.mxu0 %v965
    %v967 = vand.u32 %v85, 4294901760
    %v968 = vsub.f32 %v85, %v967
    %v969 = vand.u32 %v968, 4294901760
    %v970 = vsub.f32 %v968, %v969
    %v971 = vand.u32 %v970, 4294901760
    %972 = vmatpush.msra.mxu0 %v971
    %v973 = vand.u32 %v84, 4294901760
    %v974 = vsub.f32 %v84, %v973
    %v975 = vand.u32 %v974, 4294901760
    %v976 = vsub.f32 %v974, %v975
    %v977 = vand.u32 %v976, 4294901760
    %978 = vmatpush.msra.mxu0 %v977
    %v979 = vand.u32 %v83, 4294901760
    %v980 = vsub.f32 %v83, %v979
    %v981 = vand.u32 %v980, 4294901760
    %v982 = vsub.f32 %v980, %v981
    %v983 = vand.u32 %v982, 4294901760
    %984 = vmatpush.msra.mxu0 %v983
    %v985 = vand.u32 %v82, 4294901760
    %v986 = vsub.f32 %v82, %v985
    %v987 = vand.u32 %v986, 4294901760
    %v988 = vsub.f32 %v986, %v987
    %v989 = vand.u32 %v988, 4294901760
    %990 = vmatpush.msra.mxu0 %v989
    %v991 = vand.u32 %v81, 4294901760
    %v992 = vsub.f32 %v81, %v991
    %v993 = vand.u32 %v992, 4294901760
    %v994 = vsub.f32 %v992, %v993
    %v995 = vand.u32 %v994, 4294901760
    %996 = vmatpush.msra.mxu0 %v995
    %v997 = vand.u32 %v43, 4294901760
    %998 = vmatmul.f32.gmra.mxu0 %v997
    %v999 = vpop.f32.mrf.mxu0
    %v1000 = vadd.f32 %v899, %v999
    %1001 = vdwg.mxu0
    %v1002 = vand.u32 %v96, 4294901760
    %v1003 = vsub.f32 %v96, %v1002
    %1004 = vmatpush.msra.mxu0 %v1003
    %v1005 = vand.u32 %v95, 4294901760
    %v1006 = vsub.f32 %v95, %v1005
    %1007 = vmatpush.msra.mxu0 %v1006
    %v1008 = vand.u32 %v94, 4294901760
    %v1009 = vsub.f32 %v94, %v1008
    %1010 = vmatpush.msra.mxu0 %v1009
    %v1011 = vand.u32 %v93, 4294901760
    %v1012 = vsub.f32 %v93, %v1011
    %1013 = vmatpush.msra.mxu0 %v1012
    %v1014 = vand.u32 %v92, 4294901760
    %v1015 = vsub.f32 %v92, %v1014
    %1016 = vmatpush.msra.mxu0 %v1015
    %v1017 = vand.u32 %v91, 4294901760
    %v1018 = vsub.f32 %v91, %v1017
    %1019 = vmatpush.msra.mxu0 %v1018
    %v1020 = vand.u32 %v90, 4294901760
    %v1021 = vsub.f32 %v90, %v1020
    %1022 = vmatpush.msra.mxu0 %v1021
    %v1023 = vand.u32 %v89, 4294901760
    %v1024 = vsub.f32 %v89, %v1023
    %1025 = vmatpush.msra.mxu0 %v1024
    %v1026 = vand.u32 %v88, 4294901760
    %v1027 = vsub.f32 %v88, %v1026
    %1028 = vmatpush.msra.mxu0 %v1027
    %v1029 = vand.u32 %v87, 4294901760
    %v1030 = vsub.f32 %v87, %v1029
    %1031 = vmatpush.msra.mxu0 %v1030
    %v1032 = vand.u32 %v86, 4294901760
    %v1033 = vsub.f32 %v86, %v1032
    %1034 = vmatpush.msra.mxu0 %v1033
    %v1035 = vand.u32 %v85, 4294901760
    %v1036 = vsub.f32 %v85, %v1035
    %1037 = vmatpush.msra.mxu0 %v1036
    %v1038 = vand.u32 %v84, 4294901760
    %v1039 = vsub.f32 %v84, %v1038
    %1040 = vmatpush.msra.mxu0 %v1039
    %v1041 = vand.u32 %v83, 4294901760
    %v1042 = vsub.f32 %v83, %v1041
    %1043 = vmatpush.msra.mxu0 %v1042
    %v1044 = vand.u32 %v82, 4294901760
    %v1045 = vsub.f32 %v82, %v1044
    %1046 = vmatpush.msra.mxu0 %v1045
    %v1047 = vand.u32 %v81, 4294901760
    %v1048 = vsub.f32 %v81, %v1047
    %1049 = vmatpush.msra.mxu0 %v1048
    %v1050 = vand.u32 %v43, 4294901760
    %v1051 = vsub.f32 %v43, %v1050
    %1052 = vmatmul.f32.gmra.mxu0 %v1051
    %v1053 = vpop.f32.mrf.mxu0
    %v1054 = vadd.f32 %v1000, %v1053
    %1055 = vdwg.mxu0
    %v1056 = vand.u32 %v96, 4294901760
    %1057 = vmatpush.msra.mxu0 %v1056
    %v1058 = vand.u32 %v95, 4294901760
    %1059 = vmatpush.msra.mxu0 %v1058
    %v1060 = vand.u32 %v94, 4294901760
    %1061 = vmatpush.msra.mxu0 %v1060
    %v1062 = vand.u32 %v93, 4294901760
    %1063 = vmatpush.msra.mxu0 %v1062
    %v1064 = vand.u32 %v92, 4294901760
    %1065 = vmatpush.msra.mxu0 %v1064
    %v1066 = vand.u32 %v91, 4294901760
    %1067 = vmatpush.msra.mxu0 %v1066
    %v1068 = vand.u32 %v90, 4294901760
    %1069 = vmatpush.msra.mxu0 %v1068
    %v1070 = vand.u32 %v89, 4294901760
    %1071 = vmatpush.msra.mxu0 %v1070
    %v1072 = vand.u32 %v88, 4294901760
    %1073 = vmatpush.msra.mxu0 %v1072
    %v1074 = vand.u32 %v87, 4294901760
    %1075 = vmatpush.msra.mxu0 %v1074
    %v1076 = vand.u32 %v86, 4294901760
    %1077 = vmatpush.msra.mxu0 %v1076
    %v1078 = vand.u32 %v85, 4294901760
    %1079 = vmatpush.msra.mxu0 %v1078
    %v1080 = vand.u32 %v84, 4294901760
    %1081 = vmatpush.msra.mxu0 %v1080
    %v1082 = vand.u32 %v83, 4294901760
    %1083 = vmatpush.msra.mxu0 %v1082
    %v1084 = vand.u32 %v82, 4294901760
    %1085 = vmatpush.msra.mxu0 %v1084
    %v1086 = vand.u32 %v81, 4294901760
    %1087 = vmatpush.msra.mxu0 %v1086
    %v1088 = vand.u32 %v43, 4294901760
    %v1089 = vsub.f32 %v43, %v1088
    %v1090 = vand.u32 %v1089, 4294901760
    %1091 = vmatmul.f32.gmra.mxu0 %v1090
    %v1092 = vpop.f32.mrf.mxu0
    %v1093 = vadd.f32 %v1054, %v1092
    %1094 = vdwg.mxu0
    %v1095 = vand.u32 %v96, 4294901760
    %v1096 = vsub.f32 %v96, %v1095
    %v1097 = vand.u32 %v1096, 4294901760
    %1098 = vmatpush.msra.mxu0 %v1097
    %v1099 = vand.u32 %v95, 4294901760
    %v1100 = vsub.f32 %v95, %v1099
    %v1101 = vand.u32 %v1100, 4294901760
    %1102 = vmatpush.msra.mxu0 %v1101
    %v1103 = vand.u32 %v94, 4294901760
    %v1104 = vsub.f32 %v94, %v1103
    %v1105 = vand.u32 %v1104, 4294901760
    %1106 = vmatpush.msra.mxu0 %v1105
    %v1107 = vand.u32 %v93, 4294901760
    %v1108 = vsub.f32 %v93, %v1107
    %v1109 = vand.u32 %v1108, 4294901760
    %1110 = vmatpush.msra.mxu0 %v1109
    %v1111 = vand.u32 %v92, 4294901760
    %v1112 = vsub.f32 %v92, %v1111
    %v1113 = vand.u32 %v1112, 4294901760
    %1114 = vmatpush.msra.mxu0 %v1113
    %v1115 = vand.u32 %v91, 4294901760
    %v1116 = vsub.f32 %v91, %v1115
    %v1117 = vand.u32 %v1116, 4294901760
    %1118 = vmatpush.msra.mxu0 %v1117
    %v1119 = vand.u32 %v90, 4294901760
    %v1120 = vsub.f32 %v90, %v1119
    %v1121 = vand.u32 %v1120, 4294901760
    %1122 = vmatpush.msra.mxu0 %v1121
    %v1123 = vand.u32 %v89, 4294901760
    %v1124 = vsub.f32 %v89, %v1123
    %v1125 = vand.u32 %v1124, 4294901760
    %1126 = vmatpush.msra.mxu0 %v1125
    %v1127 = vand.u32 %v88, 4294901760
    %v1128 = vsub.f32 %v88, %v1127
    %v1129 = vand.u32 %v1128, 4294901760
    %1130 = vmatpush.msra.mxu0 %v1129
    %v1131 = vand.u32 %v87, 4294901760
    %v1132 = vsub.f32 %v87, %v1131
    %v1133 = vand.u32 %v1132, 4294901760
    %1134 = vmatpush.msra.mxu0 %v1133
    %v1135 = vand.u32 %v86, 4294901760
    %v1136 = vsub.f32 %v86, %v1135
    %v1137 = vand.u32 %v1136, 4294901760
    %1138 = vmatpush.msra.mxu0 %v1137
    %v1139 = vand.u32 %v85, 4294901760
    %v1140 = vsub.f32 %v85, %v1139
    %v1141 = vand.u32 %v1140, 4294901760
    %1142 = vmatpush.msra.mxu0 %v1141
    %v1143 = vand.u32 %v84, 4294901760
    %v1144 = vsub.f32 %v84, %v1143
    %v1145 = vand.u32 %v1144, 4294901760
    %1146 = vmatpush.msra.mxu0 %v1145
    %v1147 = vand.u32 %v83, 4294901760
    %v1148 = vsub.f32 %v83, %v1147
    %v1149 = vand.u32 %v1148, 4294901760
    %1150 = vmatpush.msra.mxu0 %v1149
    %v1151 = vand.u32 %v82, 4294901760
    %v1152 = vsub.f32 %v82, %v1151
    %v1153 = vand.u32 %v1152, 4294901760
    %1154 = vmatpush.msra.mxu0 %v1153
    %v1155 = vand.u32 %v81, 4294901760
    %v1156 = vsub.f32 %v81, %v1155
    %v1157 = vand.u32 %v1156, 4294901760
    %1158 = vmatpush.msra.mxu0 %v1157
    %v1159 = vand.u32 %v43, 4294901760
    %1160 = vmatmul.f32.gmra.mxu0 %v1159
    %v1161 = vpop.f32.mrf.mxu0
    %v1162 = vadd.f32 %v1093, %v1161
    %1163 = vdwg.mxu0
    %v1164 = vand.u32 %v96, 4294901760
    %1165 = vmatpush.msra.mxu0 %v1164
    %v1166 = vand.u32 %v95, 4294901760
    %1167 = vmatpush.msra.mxu0 %v1166
    %v1168 = vand.u32 %v94, 4294901760
    %1169 = vmatpush.msra.mxu0 %v1168
    %v1170 = vand.u32 %v93, 4294901760
    %1171 = vmatpush.msra.mxu0 %v1170
    %v1172 = vand.u32 %v92, 4294901760
    %1173 = vmatpush.msra.mxu0 %v1172
    %v1174 = vand.u32 %v91, 4294901760
    %1175 = vmatpush.msra.mxu0 %v1174
    %v1176 = vand.u32 %v90, 4294901760
    %1177 = vmatpush.msra.mxu0 %v1176
    %v1178 = vand.u32 %v89, 4294901760
    %1179 = vmatpush.msra.mxu0 %v1178
    %v1180 = vand.u32 %v88, 4294901760
    %1181 = vmatpush.msra.mxu0 %v1180
    %v1182 = vand.u32 %v87, 4294901760
    %1183 = vmatpush.msra.mxu0 %v1182
    %v1184 = vand.u32 %v86, 4294901760
    %1185 = vmatpush.msra.mxu0 %v1184
    %v1186 = vand.u32 %v85, 4294901760
    %1187 = vmatpush.msra.mxu0 %v1186
    %v1188 = vand.u32 %v84, 4294901760
    %1189 = vmatpush.msra.mxu0 %v1188
    %v1190 = vand.u32 %v83, 4294901760
    %1191 = vmatpush.msra.mxu0 %v1190
    %v1192 = vand.u32 %v82, 4294901760
    %1193 = vmatpush.msra.mxu0 %v1192
    %v1194 = vand.u32 %v81, 4294901760
    %1195 = vmatpush.msra.mxu0 %v1194
    %v1196 = vand.u32 %v43, 4294901760
    %1197 = vmatmul.f32.gmra.mxu0 %v1196
    %v1198 = vpop.f32.mrf.mxu0
    %v1199 = vadd.f32 %v1162, %v1198
    %1200 = vdwg.mxu0
    %v1201 = vand.u32 %v112, 4294901760
    %1202 = vmatpush.msra.mxu0 %v1201
    %v1203 = vand.u32 %v111, 4294901760
    %1204 = vmatpush.msra.mxu0 %v1203
    %v1205 = vand.u32 %v110, 4294901760
    %1206 = vmatpush.msra.mxu0 %v1205
    %v1207 = vand.u32 %v109, 4294901760
    %1208 = vmatpush.msra.mxu0 %v1207
    %v1209 = vand.u32 %v108, 4294901760
    %1210 = vmatpush.msra.mxu0 %v1209
    %v1211 = vand.u32 %v107, 4294901760
    %1212 = vmatpush.msra.mxu0 %v1211
    %v1213 = vand.u32 %v106, 4294901760
    %1214 = vmatpush.msra.mxu0 %v1213
    %v1215 = vand.u32 %v105, 4294901760
    %1216 = vmatpush.msra.mxu0 %v1215
    %v1217 = vand.u32 %v104, 4294901760
    %1218 = vmatpush.msra.mxu0 %v1217
    %v1219 = vand.u32 %v103, 4294901760
    %1220 = vmatpush.msra.mxu0 %v1219
    %v1221 = vand.u32 %v102, 4294901760
    %1222 = vmatpush.msra.mxu0 %v1221
    %v1223 = vand.u32 %v101, 4294901760
    %1224 = vmatpush.msra.mxu0 %v1223
    %v1225 = vand.u32 %v100, 4294901760
    %1226 = vmatpush.msra.mxu0 %v1225
    %v1227 = vand.u32 %v99, 4294901760
    %1228 = vmatpush.msra.mxu0 %v1227
    %v1229 = vand.u32 %v98, 4294901760
    %1230 = vmatpush.msra.mxu0 %v1229
    %v1231 = vand.u32 %v97, 4294901760
    %1232 = vmatpush.msra.mxu0 %v1231
    %v1233 = vand.u32 %v44, 4294901760
    %v1234 = vsub.f32 %v44, %v1233
    %v1235 = vand.u32 %v1234, 4294901760
    %v1236 = vsub.f32 %v1234, %v1235
    %v1237 = vand.u32 %v1236, 4294901760
    %1238 = vmatmul.f32.gmra.mxu0 %v1237
    %v1239 = vpop.f32.mrf.mxu0
    %v1240 = vadd.f32 %v1199, %v1239
    %1241 = vdwg.mxu0
    %v1242 = vand.u32 %v112, 4294901760
    %v1243 = vsub.f32 %v112, %v1242
    %v1244 = vand.u32 %v1243, 4294901760
    %v1245 = vsub.f32 %v1243, %v1244
    %v1246 = vand.u32 %v1245, 4294901760
    %1247 = vmatpush.msra.mxu0 %v1246
    %v1248 = vand.u32 %v111, 4294901760
    %v1249 = vsub.f32 %v111, %v1248
    %v1250 = vand.u32 %v1249, 4294901760
    %v1251 = vsub.f32 %v1249, %v1250
    %v1252 = vand.u32 %v1251, 4294901760
    %1253 = vmatpush.msra.mxu0 %v1252
    %v1254 = vand.u32 %v110, 4294901760
    %v1255 = vsub.f32 %v110, %v1254
    %v1256 = vand.u32 %v1255, 4294901760
    %v1257 = vsub.f32 %v1255, %v1256
    %v1258 = vand.u32 %v1257, 4294901760
    %1259 = vmatpush.msra.mxu0 %v1258
    %v1260 = vand.u32 %v109, 4294901760
    %v1261 = vsub.f32 %v109, %v1260
    %v1262 = vand.u32 %v1261, 4294901760
    %v1263 = vsub.f32 %v1261, %v1262
    %v1264 = vand.u32 %v1263, 4294901760
    %1265 = vmatpush.msra.mxu0 %v1264
    %v1266 = vand.u32 %v108, 4294901760
    %v1267 = vsub.f32 %v108, %v1266
    %v1268 = vand.u32 %v1267, 4294901760
    %v1269 = vsub.f32 %v1267, %v1268
    %v1270 = vand.u32 %v1269, 4294901760
    %1271 = vmatpush.msra.mxu0 %v1270
    %v1272 = vand.u32 %v107, 4294901760
    %v1273 = vsub.f32 %v107, %v1272
    %v1274 = vand.u32 %v1273, 4294901760
    %v1275 = vsub.f32 %v1273, %v1274
    %v1276 = vand.u32 %v1275, 4294901760
    %1277 = vmatpush.msra.mxu0 %v1276
    %v1278 = vand.u32 %v106, 4294901760
    %v1279 = vsub.f32 %v106, %v1278
    %v1280 = vand.u32 %v1279, 4294901760
    %v1281 = vsub.f32 %v1279, %v1280
    %v1282 = vand.u32 %v1281, 4294901760
    %1283 = vmatpush.msra.mxu0 %v1282
    %v1284 = vand.u32 %v105, 4294901760
    %v1285 = vsub.f32 %v105, %v1284
    %v1286 = vand.u32 %v1285, 4294901760
    %v1287 = vsub.f32 %v1285, %v1286
    %v1288 = vand.u32 %v1287, 4294901760
    %1289 = vmatpush.msra.mxu0 %v1288
    %v1290 = vand.u32 %v104, 4294901760
    %v1291 = vsub.f32 %v104, %v1290
    %v1292 = vand.u32 %v1291, 4294901760
    %v1293 = vsub.f32 %v1291, %v1292
    %v1294 = vand.u32 %v1293, 4294901760
    %1295 = vmatpush.msra.mxu0 %v1294
    %v1296 = vand.u32 %v103, 4294901760
    %v1297 = vsub.f32 %v103, %v1296
    %v1298 = vand.u32 %v1297, 4294901760
    %v1299 = vsub.f32 %v1297, %v1298
    %v1300 = vand.u32 %v1299, 4294901760
    %1301 = vmatpush.msra.mxu0 %v1300
    %v1302 = vand.u32 %v102, 4294901760
    %v1303 = vsub.f32 %v102, %v1302
    %v1304 = vand.u32 %v1303, 4294901760
    %v1305 = vsub.f32 %v1303, %v1304
    %v1306 = vand.u32 %v1305, 4294901760
    %1307 = vmatpush.msra.mxu0 %v1306
    %v1308 = vand.u32 %v101, 4294901760
    %v1309 = vsub.f32 %v101, %v1308
    %v1310 = vand.u32 %v1309, 4294901760
    %v1311 = vsub.f32 %v1309, %v1310
    %v1312 = vand.u32 %v1311, 4294901760
    %1313 = vmatpush.msra.mxu0 %v1312
    %v1314 = vand.u32 %v100, 4294901760
    %v1315 = vsub.f32 %v100, %v1314
    %v1316 = vand.u32 %v1315, 4294901760
    %v1317 = vsub.f32 %v1315, %v1316
    %v1318 = vand.u32 %v1317, 4294901760
    %1319 = vmatpush.msra.mxu0 %v1318
    %v1320 = vand.u32 %v99, 4294901760
    %v1321 = vsub.f32 %v99, %v1320
    %v1322 = vand.u32 %v1321, 4294901760
    %v1323 = vsub.f32 %v1321, %v1322
    %v1324 = vand.u32 %v1323, 4294901760
    %1325 = vmatpush.msra.mxu0 %v1324
    %v1326 = vand.u32 %v98, 4294901760
    %v1327 = vsub.f32 %v98, %v1326
    %v1328 = vand.u32 %v1327, 4294901760
    %v1329 = vsub.f32 %v1327, %v1328
    %v1330 = vand.u32 %v1329, 4294901760
    %1331 = vmatpush.msra.mxu0 %v1330
    %v1332 = vand.u32 %v97, 4294901760
    %v1333 = vsub.f32 %v97, %v1332
    %v1334 = vand.u32 %v1333, 4294901760
    %v1335 = vsub.f32 %v1333, %v1334
    %v1336 = vand.u32 %v1335, 4294901760
    %1337 = vmatpush.msra.mxu0 %v1336
    %v1338 = vand.u32 %v44, 4294901760
    %1339 = vmatmul.f32.gmra.mxu0 %v1338
    %v1340 = vpop.f32.mrf.mxu0
    %v1341 = vadd.f32 %v1240, %v1340
    %1342 = vdwg.mxu0
    %v1343 = vand.u32 %v112, 4294901760
    %v1344 = vsub.f32 %v112, %v1343
    %1345 = vmatpush.msra.mxu0 %v1344
    %v1346 = vand.u32 %v111, 4294901760
    %v1347 = vsub.f32 %v111, %v1346
    %1348 = vmatpush.msra.mxu0 %v1347
    %v1349 = vand.u32 %v110, 4294901760
    %v1350 = vsub.f32 %v110, %v1349
    %1351 = vmatpush.msra.mxu0 %v1350
    %v1352 = vand.u32 %v109, 4294901760
    %v1353 = vsub.f32 %v109, %v1352
    %1354 = vmatpush.msra.mxu0 %v1353
    %v1355 = vand.u32 %v108, 4294901760
    %v1356 = vsub.f32 %v108, %v1355
    %1357 = vmatpush.msra.mxu0 %v1356
    %v1358 = vand.u32 %v107, 4294901760
    %v1359 = vsub.f32 %v107, %v1358
    %1360 = vmatpush.msra.mxu0 %v1359
    %v1361 = vand.u32 %v106, 4294901760
    %v1362 = vsub.f32 %v106, %v1361
    %1363 = vmatpush.msra.mxu0 %v1362
    %v1364 = vand.u32 %v105, 4294901760
    %v1365 = vsub.f32 %v105, %v1364
    %1366 = vmatpush.msra.mxu0 %v1365
    %v1367 = vand.u32 %v104, 4294901760
    %v1368 = vsub.f32 %v104, %v1367
    %1369 = vmatpush.msra.mxu0 %v1368
    %v1370 = vand.u32 %v103, 4294901760
    %v1371 = vsub.f32 %v103, %v1370
    %1372 = vmatpush.msra.mxu0 %v1371
    %v1373 = vand.u32 %v102, 4294901760
    %v1374 = vsub.f32 %v102, %v1373
    %1375 = vmatpush.msra.mxu0 %v1374
    %v1376 = vand.u32 %v101, 4294901760
    %v1377 = vsub.f32 %v101, %v1376
    %1378 = vmatpush.msra.mxu0 %v1377
    %v1379 = vand.u32 %v100, 4294901760
    %v1380 = vsub.f32 %v100, %v1379
    %1381 = vmatpush.msra.mxu0 %v1380
    %v1382 = vand.u32 %v99, 4294901760
    %v1383 = vsub.f32 %v99, %v1382
    %1384 = vmatpush.msra.mxu0 %v1383
    %v1385 = vand.u32 %v98, 4294901760
    %v1386 = vsub.f32 %v98, %v1385
    %1387 = vmatpush.msra.mxu0 %v1386
    %v1388 = vand.u32 %v97, 4294901760
    %v1389 = vsub.f32 %v97, %v1388
    %1390 = vmatpush.msra.mxu0 %v1389
    %v1391 = vand.u32 %v44, 4294901760
    %v1392 = vsub.f32 %v44, %v1391
    %1393 = vmatmul.f32.gmra.mxu0 %v1392
    %v1394 = vpop.f32.mrf.mxu0
    %v1395 = vadd.f32 %v1341, %v1394
    %1396 = vdwg.mxu0
    %v1397 = vand.u32 %v112, 4294901760
    %1398 = vmatpush.msra.mxu0 %v1397
    %v1399 = vand.u32 %v111, 4294901760
    %1400 = vmatpush.msra.mxu0 %v1399
    %v1401 = vand.u32 %v110, 4294901760
    %1402 = vmatpush.msra.mxu0 %v1401
    %v1403 = vand.u32 %v109, 4294901760
    %1404 = vmatpush.msra.mxu0 %v1403
    %v1405 = vand.u32 %v108, 4294901760
    %1406 = vmatpush.msra.mxu0 %v1405
    %v1407 = vand.u32 %v107, 4294901760
    %1408 = vmatpush.msra.mxu0 %v1407
    %v1409 = vand.u32 %v106, 4294901760
    %1410 = vmatpush.msra.mxu0 %v1409
    %v1411 = vand.u32 %v105, 4294901760
    %1412 = vmatpush.msra.mxu0 %v1411
    %v1413 = vand.u32 %v104, 4294901760
    %1414 = vmatpush.msra.mxu0 %v1413
    %v1415 = vand.u32 %v103, 4294901760
    %1416 = vmatpush.msra.mxu0 %v1415
    %v1417 = vand.u32 %v102, 4294901760
    %1418 = vmatpush.msra.mxu0 %v1417
    %v1419 = vand.u32 %v101, 4294901760
    %1420 = vmatpush.msra.mxu0 %v1419
    %v1421 = vand.u32 %v100, 4294901760
    %1422 = vmatpush.msra.mxu0 %v1421
    %v1423 = vand.u32 %v99, 4294901760
    %1424 = vmatpush.msra.mxu0 %v1423
    %v1425 = vand.u32 %v98, 4294901760
    %1426 = vmatpush.msra.mxu0 %v1425
    %v1427 = vand.u32 %v97, 4294901760
    %1428 = vmatpush.msra.mxu0 %v1427
    %v1429 = vand.u32 %v44, 4294901760
    %v1430 = vsub.f32 %v44, %v1429
    %v1431 = vand.u32 %v1430, 4294901760
    %1432 = vmatmul.f32.gmra.mxu0 %v1431
    %v1433 = vpop.f32.mrf.mxu0
    %v1434 = vadd.f32 %v1395, %v1433
    %1435 = vdwg.mxu0
    %v1436 = vand.u32 %v112, 4294901760
    %v1437 = vsub.f32 %v112, %v1436
    %v1438 = vand.u32 %v1437, 4294901760
    %1439 = vmatpush.msra.mxu0 %v1438
    %v1440 = vand.u32 %v111, 4294901760
    %v1441 = vsub.f32 %v111, %v1440
    %v1442 = vand.u32 %v1441, 4294901760
    %1443 = vmatpush.msra.mxu0 %v1442
    %v1444 = vand.u32 %v110, 4294901760
    %v1445 = vsub.f32 %v110, %v1444
    %v1446 = vand.u32 %v1445, 4294901760
    %1447 = vmatpush.msra.mxu0 %v1446
    %v1448 = vand.u32 %v109, 4294901760
    %v1449 = vsub.f32 %v109, %v1448
    %v1450 = vand.u32 %v1449, 4294901760
    %1451 = vmatpush.msra.mxu0 %v1450
    %v1452 = vand.u32 %v108, 4294901760
    %v1453 = vsub.f32 %v108, %v1452
    %v1454 = vand.u32 %v1453, 4294901760
    %1455 = vmatpush.msra.mxu0 %v1454
    %v1456 = vand.u32 %v107, 4294901760
    %v1457 = vsub.f32 %v107, %v1456
    %v1458 = vand.u32 %v1457, 4294901760
    %1459 = vmatpush.msra.mxu0 %v1458
    %v1460 = vand.u32 %v106, 4294901760
    %v1461 = vsub.f32 %v106, %v1460
    %v1462 = vand.u32 %v1461, 4294901760
    %1463 = vmatpush.msra.mxu0 %v1462
    %v1464 = vand.u32 %v105, 4294901760
    %v1465 = vsub.f32 %v105, %v1464
    %v1466 = vand.u32 %v1465, 4294901760
    %1467 = vmatpush.msra.mxu0 %v1466
    %v1468 = vand.u32 %v104, 4294901760
    %v1469 = vsub.f32 %v104, %v1468
    %v1470 = vand.u32 %v1469, 4294901760
    %1471 = vmatpush.msra.mxu0 %v1470
    %v1472 = vand.u32 %v103, 4294901760
    %v1473 = vsub.f32 %v103, %v1472
    %v1474 = vand.u32 %v1473, 4294901760
    %1475 = vmatpush.msra.mxu0 %v1474
    %v1476 = vand.u32 %v102, 4294901760
    %v1477 = vsub.f32 %v102, %v1476
    %v1478 = vand.u32 %v1477, 4294901760
    %1479 = vmatpush.msra.mxu0 %v1478
    %v1480 = vand.u32 %v101, 4294901760
    %v1481 = vsub.f32 %v101, %v1480
    %v1482 = vand.u32 %v1481, 4294901760
    %1483 = vmatpush.msra.mxu0 %v1482
    %v1484 = vand.u32 %v100, 4294901760
    %v1485 = vsub.f32 %v100, %v1484
    %v1486 = vand.u32 %v1485, 4294901760
    %1487 = vmatpush.msra.mxu0 %v1486
    %v1488 = vand.u32 %v99, 4294901760
    %v1489 = vsub.f32 %v99, %v1488
    %v1490 = vand.u32 %v1489, 4294901760
    %1491 = vmatpush.msra.mxu0 %v1490
    %v1492 = vand.u32 %v98, 4294901760
    %v1493 = vsub.f32 %v98, %v1492
    %v1494 = vand.u32 %v1493, 4294901760
    %1495 = vmatpush.msra.mxu0 %v1494
    %v1496 = vand.u32 %v97, 4294901760
    %v1497 = vsub.f32 %v97, %v1496
    %v1498 = vand.u32 %v1497, 4294901760
    %1499 = vmatpush.msra.mxu0 %v1498
    %v1500 = vand.u32 %v44, 4294901760
    %1501 = vmatmul.f32.gmra.mxu0 %v1500
    %v1502 = vpop.f32.mrf.mxu0
    %v1503 = vadd.f32 %v1434, %v1502
    %1504 = vdwg.mxu0
    %v1505 = vand.u32 %v112, 4294901760
    %1506 = vmatpush.msra.mxu0 %v1505
    %v1507 = vand.u32 %v111, 4294901760
    %1508 = vmatpush.msra.mxu0 %v1507
    %v1509 = vand.u32 %v110, 4294901760
    %1510 = vmatpush.msra.mxu0 %v1509
    %v1511 = vand.u32 %v109, 4294901760
    %1512 = vmatpush.msra.mxu0 %v1511
    %v1513 = vand.u32 %v108, 4294901760
    %1514 = vmatpush.msra.mxu0 %v1513
    %v1515 = vand.u32 %v107, 4294901760
    %1516 = vmatpush.msra.mxu0 %v1515
    %v1517 = vand.u32 %v106, 4294901760
    %1518 = vmatpush.msra.mxu0 %v1517
    %v1519 = vand.u32 %v105, 4294901760
    %1520 = vmatpush.msra.mxu0 %v1519
    %v1521 = vand.u32 %v104, 4294901760
    %1522 = vmatpush.msra.mxu0 %v1521
    %v1523 = vand.u32 %v103, 4294901760
    %1524 = vmatpush.msra.mxu0 %v1523
    %v1525 = vand.u32 %v102, 4294901760
    %1526 = vmatpush.msra.mxu0 %v1525
    %v1527 = vand.u32 %v101, 4294901760
    %1528 = vmatpush.msra.mxu0 %v1527
    %v1529 = vand.u32 %v100, 4294901760
    %1530 = vmatpush.msra.mxu0 %v1529
    %v1531 = vand.u32 %v99, 4294901760
    %1532 = vmatpush.msra.mxu0 %v1531
    %v1533 = vand.u32 %v98, 4294901760
    %1534 = vmatpush.msra.mxu0 %v1533
    %v1535 = vand.u32 %v97, 4294901760
    %1536 = vmatpush.msra.mxu0 %v1535
    %v1537 = vand.u32 %v44, 4294901760
    %1538 = vmatmul.f32.gmra.mxu0 %v1537
    %v1539 = vpop.f32.mrf.mxu0
    %v1540 = vadd.f32 %v1503, %v1539
    %1541 = vdwg.mxu0
    %v1542 = vand.u32 %v128, 4294901760
    %1543 = vmatpush.msra.mxu0 %v1542
    %v1544 = vand.u32 %v127, 4294901760
    %1545 = vmatpush.msra.mxu0 %v1544
    %v1546 = vand.u32 %v126, 4294901760
    %1547 = vmatpush.msra.mxu0 %v1546
    %v1548 = vand.u32 %v125, 4294901760
    %1549 = vmatpush.msra.mxu0 %v1548
    %v1550 = vand.u32 %v124, 4294901760
    %1551 = vmatpush.msra.mxu0 %v1550
    %v1552 = vand.u32 %v123, 4294901760
    %1553 = vmatpush.msra.mxu0 %v1552
    %v1554 = vand.u32 %v122, 4294901760
    %1555 = vmatpush.msra.mxu0 %v1554
    %v1556 = vand.u32 %v121, 4294901760
    %1557 = vmatpush.msra.mxu0 %v1556
    %v1558 = vand.u32 %v120, 4294901760
    %1559 = vmatpush.msra.mxu0 %v1558
    %v1560 = vand.u32 %v119, 4294901760
    %1561 = vmatpush.msra.mxu0 %v1560
    %v1562 = vand.u32 %v118, 4294901760
    %1563 = vmatpush.msra.mxu0 %v1562
    %v1564 = vand.u32 %v117, 4294901760
    %1565 = vmatpush.msra.mxu0 %v1564
    %v1566 = vand.u32 %v116, 4294901760
    %1567 = vmatpush.msra.mxu0 %v1566
    %v1568 = vand.u32 %v115, 4294901760
    %1569 = vmatpush.msra.mxu0 %v1568
    %v1570 = vand.u32 %v114, 4294901760
    %1571 = vmatpush.msra.mxu0 %v1570
    %v1572 = vand.u32 %v113, 4294901760
    %1573 = vmatpush.msra.mxu0 %v1572
    %v1574 = vand.u32 %v45, 4294901760
    %v1575 = vsub.f32 %v45, %v1574
    %v1576 = vand.u32 %v1575, 4294901760
    %v1577 = vsub.f32 %v1575, %v1576
    %v1578 = vand.u32 %v1577, 4294901760
    %1579 = vmatmul.f32.gmra.mxu0 %v1578
    %v1580 = vpop.f32.mrf.mxu0
    %v1581 = vadd.f32 %v1540, %v1580
    %1582 = vdwg.mxu0
    %v1583 = vand.u32 %v128, 4294901760
    %v1584 = vsub.f32 %v128, %v1583
    %v1585 = vand.u32 %v1584, 4294901760
    %v1586 = vsub.f32 %v1584, %v1585
    %v1587 = vand.u32 %v1586, 4294901760
    %1588 = vmatpush.msra.mxu0 %v1587
    %v1589 = vand.u32 %v127, 4294901760
    %v1590 = vsub.f32 %v127, %v1589
    %v1591 = vand.u32 %v1590, 4294901760
    %v1592 = vsub.f32 %v1590, %v1591
    %v1593 = vand.u32 %v1592, 4294901760
    %1594 = vmatpush.msra.mxu0 %v1593
    %v1595 = vand.u32 %v126, 4294901760
    %v1596 = vsub.f32 %v126, %v1595
    %v1597 = vand.u32 %v1596, 4294901760
    %v1598 = vsub.f32 %v1596, %v1597
    %v1599 = vand.u32 %v1598, 4294901760
    %1600 = vmatpush.msra.mxu0 %v1599
    %v1601 = vand.u32 %v125, 4294901760
    %v1602 = vsub.f32 %v125, %v1601
    %v1603 = vand.u32 %v1602, 4294901760
    %v1604 = vsub.f32 %v1602, %v1603
    %v1605 = vand.u32 %v1604, 4294901760
    %1606 = vmatpush.msra.mxu0 %v1605
    %v1607 = vand.u32 %v124, 4294901760
    %v1608 = vsub.f32 %v124, %v1607
    %v1609 = vand.u32 %v1608, 4294901760
    %v1610 = vsub.f32 %v1608, %v1609
    %v1611 = vand.u32 %v1610, 4294901760
    %1612 = vmatpush.msra.mxu0 %v1611
    %v1613 = vand.u32 %v123, 4294901760
    %v1614 = vsub.f32 %v123, %v1613
    %v1615 = vand.u32 %v1614, 4294901760
    %v1616 = vsub.f32 %v1614, %v1615
    %v1617 = vand.u32 %v1616, 4294901760
    %1618 = vmatpush.msra.mxu0 %v1617
    %v1619 = vand.u32 %v122, 4294901760
    %v1620 = vsub.f32 %v122, %v1619
    %v1621 = vand.u32 %v1620, 4294901760
    %v1622 = vsub.f32 %v1620, %v1621
    %v1623 = vand.u32 %v1622, 4294901760
    %1624 = vmatpush.msra.mxu0 %v1623
    %v1625 = vand.u32 %v121, 4294901760
    %v1626 = vsub.f32 %v121, %v1625
    %v1627 = vand.u32 %v1626, 4294901760
    %v1628 = vsub.f32 %v1626, %v1627
    %v1629 = vand.u32 %v1628, 4294901760
    %1630 = vmatpush.msra.mxu0 %v1629
    %v1631 = vand.u32 %v120, 4294901760
    %v1632 = vsub.f32 %v120, %v1631
    %v1633 = vand.u32 %v1632, 4294901760
    %v1634 = vsub.f32 %v1632, %v1633
    %v1635 = vand.u32 %v1634, 4294901760
    %1636 = vmatpush.msra.mxu0 %v1635
    %v1637 = vand.u32 %v119, 4294901760
    %v1638 = vsub.f32 %v119, %v1637
    %v1639 = vand.u32 %v1638, 4294901760
    %v1640 = vsub.f32 %v1638, %v1639
    %v1641 = vand.u32 %v1640, 4294901760
    %1642 = vmatpush.msra.mxu0 %v1641
    %v1643 = vand.u32 %v118, 4294901760
    %v1644 = vsub.f32 %v118, %v1643
    %v1645 = vand.u32 %v1644, 4294901760
    %v1646 = vsub.f32 %v1644, %v1645
    %v1647 = vand.u32 %v1646, 4294901760
    %1648 = vmatpush.msra.mxu0 %v1647
    %v1649 = vand.u32 %v117, 4294901760
    %v1650 = vsub.f32 %v117, %v1649
    %v1651 = vand.u32 %v1650, 4294901760
    %v1652 = vsub.f32 %v1650, %v1651
    %v1653 = vand.u32 %v1652, 4294901760
    %1654 = vmatpush.msra.mxu0 %v1653
    %v1655 = vand.u32 %v116, 4294901760
    %v1656 = vsub.f32 %v116, %v1655
    %v1657 = vand.u32 %v1656, 4294901760
    %v1658 = vsub.f32 %v1656, %v1657
    %v1659 = vand.u32 %v1658, 4294901760
    %1660 = vmatpush.msra.mxu0 %v1659
    %v1661 = vand.u32 %v115, 4294901760
    %v1662 = vsub.f32 %v115, %v1661
    %v1663 = vand.u32 %v1662, 4294901760
    %v1664 = vsub.f32 %v1662, %v1663
    %v1665 = vand.u32 %v1664, 4294901760
    %1666 = vmatpush.msra.mxu0 %v1665
    %v1667 = vand.u32 %v114, 4294901760
    %v1668 = vsub.f32 %v114, %v1667
    %v1669 = vand.u32 %v1668, 4294901760
    %v1670 = vsub.f32 %v1668, %v1669
    %v1671 = vand.u32 %v1670, 4294901760
    %1672 = vmatpush.msra.mxu0 %v1671
    %v1673 = vand.u32 %v113, 4294901760
    %v1674 = vsub.f32 %v113, %v1673
    %v1675 = vand.u32 %v1674, 4294901760
    %v1676 = vsub.f32 %v1674, %v1675
    %v1677 = vand.u32 %v1676, 4294901760
    %1678 = vmatpush.msra.mxu0 %v1677
    %v1679 = vand.u32 %v45, 4294901760
    %1680 = vmatmul.f32.gmra.mxu0 %v1679
    %v1681 = vpop.f32.mrf.mxu0
    %v1682 = vadd.f32 %v1581, %v1681
    %1683 = vdwg.mxu0
    %v1684 = vand.u32 %v128, 4294901760
    %v1685 = vsub.f32 %v128, %v1684
    %1686 = vmatpush.msra.mxu0 %v1685
    %v1687 = vand.u32 %v127, 4294901760
    %v1688 = vsub.f32 %v127, %v1687
    %1689 = vmatpush.msra.mxu0 %v1688
    %v1690 = vand.u32 %v126, 4294901760
    %v1691 = vsub.f32 %v126, %v1690
    %1692 = vmatpush.msra.mxu0 %v1691
    %v1693 = vand.u32 %v125, 4294901760
    %v1694 = vsub.f32 %v125, %v1693
    %1695 = vmatpush.msra.mxu0 %v1694
    %v1696 = vand.u32 %v124, 4294901760
    %v1697 = vsub.f32 %v124, %v1696
    %1698 = vmatpush.msra.mxu0 %v1697
    %v1699 = vand.u32 %v123, 4294901760
    %v1700 = vsub.f32 %v123, %v1699
    %1701 = vmatpush.msra.mxu0 %v1700
    %v1702 = vand.u32 %v122, 4294901760
    %v1703 = vsub.f32 %v122, %v1702
    %1704 = vmatpush.msra.mxu0 %v1703
    %v1705 = vand.u32 %v121, 4294901760
    %v1706 = vsub.f32 %v121, %v1705
    %1707 = vmatpush.msra.mxu0 %v1706
    %v1708 = vand.u32 %v120, 4294901760
    %v1709 = vsub.f32 %v120, %v1708
    %1710 = vmatpush.msra.mxu0 %v1709
    %v1711 = vand.u32 %v119, 4294901760
    %v1712 = vsub.f32 %v119, %v1711
    %1713 = vmatpush.msra.mxu0 %v1712
    %v1714 = vand.u32 %v118, 4294901760
    %v1715 = vsub.f32 %v118, %v1714
    %1716 = vmatpush.msra.mxu0 %v1715
    %v1717 = vand.u32 %v117, 4294901760
    %v1718 = vsub.f32 %v117, %v1717
    %1719 = vmatpush.msra.mxu0 %v1718
    %v1720 = vand.u32 %v116, 4294901760
    %v1721 = vsub.f32 %v116, %v1720
    %1722 = vmatpush.msra.mxu0 %v1721
    %v1723 = vand.u32 %v115, 4294901760
    %v1724 = vsub.f32 %v115, %v1723
    %1725 = vmatpush.msra.mxu0 %v1724
    %v1726 = vand.u32 %v114, 4294901760
    %v1727 = vsub.f32 %v114, %v1726
    %1728 = vmatpush.msra.mxu0 %v1727
    %v1729 = vand.u32 %v113, 4294901760
    %v1730 = vsub.f32 %v113, %v1729
    %1731 = vmatpush.msra.mxu0 %v1730
    %v1732 = vand.u32 %v45, 4294901760
    %v1733 = vsub.f32 %v45, %v1732
    %1734 = vmatmul.f32.gmra.mxu0 %v1733
    %v1735 = vpop.f32.mrf.mxu0
    %v1736 = vadd.f32 %v1682, %v1735
    %1737 = vdwg.mxu0
    %v1738 = vand.u32 %v128, 4294901760
    %1739 = vmatpush.msra.mxu0 %v1738
    %v1740 = vand.u32 %v127, 4294901760
    %1741 = vmatpush.msra.mxu0 %v1740
    %v1742 = vand.u32 %v126, 4294901760
    %1743 = vmatpush.msra.mxu0 %v1742
    %v1744 = vand.u32 %v125, 4294901760
    %1745 = vmatpush.msra.mxu0 %v1744
    %v1746 = vand.u32 %v124, 4294901760
    %1747 = vmatpush.msra.mxu0 %v1746
    %v1748 = vand.u32 %v123, 4294901760
    %1749 = vmatpush.msra.mxu0 %v1748
    %v1750 = vand.u32 %v122, 4294901760
    %1751 = vmatpush.msra.mxu0 %v1750
    %v1752 = vand.u32 %v121, 4294901760
    %1753 = vmatpush.msra.mxu0 %v1752
    %v1754 = vand.u32 %v120, 4294901760
    %1755 = vmatpush.msra.mxu0 %v1754
    %v1756 = vand.u32 %v119, 4294901760
    %1757 = vmatpush.msra.mxu0 %v1756
    %v1758 = vand.u32 %v118, 4294901760
    %1759 = vmatpush.msra.mxu0 %v1758
    %v1760 = vand.u32 %v117, 4294901760
    %1761 = vmatpush.msra.mxu0 %v1760
    %v1762 = vand.u32 %v116, 4294901760
    %1763 = vmatpush.msra.mxu0 %v1762
    %v1764 = vand.u32 %v115, 4294901760
    %1765 = vmatpush.msra.mxu0 %v1764
    %v1766 = vand.u32 %v114, 4294901760
    %1767 = vmatpush.msra.mxu0 %v1766
    %v1768 = vand.u32 %v113, 4294901760
    %1769 = vmatpush.msra.mxu0 %v1768
    %v1770 = vand.u32 %v45, 4294901760
    %v1771 = vsub.f32 %v45, %v1770
    %v1772 = vand.u32 %v1771, 4294901760
    %1773 = vmatmul.f32.gmra.mxu0 %v1772
    %v1774 = vpop.f32.mrf.mxu0
    %v1775 = vadd.f32 %v1736, %v1774
    %1776 = vdwg.mxu0
    %v1777 = vand.u32 %v128, 4294901760
    %v1778 = vsub.f32 %v128, %v1777
    %v1779 = vand.u32 %v1778, 4294901760
    %1780 = vmatpush.msra.mxu0 %v1779
    %v1781 = vand.u32 %v127, 4294901760
    %v1782 = vsub.f32 %v127, %v1781
    %v1783 = vand.u32 %v1782, 4294901760
    %1784 = vmatpush.msra.mxu0 %v1783
    %v1785 = vand.u32 %v126, 4294901760
    %v1786 = vsub.f32 %v126, %v1785
    %v1787 = vand.u32 %v1786, 4294901760
    %1788 = vmatpush.msra.mxu0 %v1787
    %v1789 = vand.u32 %v125, 4294901760
    %v1790 = vsub.f32 %v125, %v1789
    %v1791 = vand.u32 %v1790, 4294901760
    %1792 = vmatpush.msra.mxu0 %v1791
    %v1793 = vand.u32 %v124, 4294901760
    %v1794 = vsub.f32 %v124, %v1793
    %v1795 = vand.u32 %v1794, 4294901760
    %1796 = vmatpush.msra.mxu0 %v1795
    %v1797 = vand.u32 %v123, 4294901760
    %v1798 = vsub.f32 %v123, %v1797
    %v1799 = vand.u32 %v1798, 4294901760
    %1800 = vmatpush.msra.mxu0 %v1799
    %v1801 = vand.u32 %v122, 4294901760
    %v1802 = vsub.f32 %v122, %v1801
    %v1803 = vand.u32 %v1802, 4294901760
    %1804 = vmatpush.msra.mxu0 %v1803
    %v1805 = vand.u32 %v121, 4294901760
    %v1806 = vsub.f32 %v121, %v1805
    %v1807 = vand.u32 %v1806, 4294901760
    %1808 = vmatpush.msra.mxu0 %v1807
    %v1809 = vand.u32 %v120, 4294901760
    %v1810 = vsub.f32 %v120, %v1809
    %v1811 = vand.u32 %v1810, 4294901760
    %1812 = vmatpush.msra.mxu0 %v1811
    %v1813 = vand.u32 %v119, 4294901760
    %v1814 = vsub.f32 %v119, %v1813
    %v1815 = vand.u32 %v1814, 4294901760
    %1816 = vmatpush.msra.mxu0 %v1815
    %v1817 = vand.u32 %v118, 4294901760
    %v1818 = vsub.f32 %v118, %v1817
    %v1819 = vand.u32 %v1818, 4294901760
    %1820 = vmatpush.msra.mxu0 %v1819
    %v1821 = vand.u32 %v117, 4294901760
    %v1822 = vsub.f32 %v117, %v1821
    %v1823 = vand.u32 %v1822, 4294901760
    %1824 = vmatpush.msra.mxu0 %v1823
    %v1825 = vand.u32 %v116, 4294901760
    %v1826 = vsub.f32 %v116, %v1825
    %v1827 = vand.u32 %v1826, 4294901760
    %1828 = vmatpush.msra.mxu0 %v1827
    %v1829 = vand.u32 %v115, 4294901760
    %v1830 = vsub.f32 %v115, %v1829
    %v1831 = vand.u32 %v1830, 4294901760
    %1832 = vmatpush.msra.mxu0 %v1831
    %v1833 = vand.u32 %v114, 4294901760
    %v1834 = vsub.f32 %v114, %v1833
    %v1835 = vand.u32 %v1834, 4294901760
    %1836 = vmatpush.msra.mxu0 %v1835
    %v1837 = vand.u32 %v113, 4294901760
    %v1838 = vsub.f32 %v113, %v1837
    %v1839 = vand.u32 %v1838, 4294901760
    %1840 = vmatpush.msra.mxu0 %v1839
    %v1841 = vand.u32 %v45, 4294901760
    %1842 = vmatmul.f32.gmra.mxu0 %v1841
    %v1843 = vpop.f32.mrf.mxu0
    %v1844 = vadd.f32 %v1775, %v1843
    %1845 = vdwg.mxu0
    %v1846 = vand.u32 %v128, 4294901760
    %1847 = vmatpush.msra.mxu0 %v1846
    %v1848 = vand.u32 %v127, 4294901760
    %1849 = vmatpush.msra.mxu0 %v1848
    %v1850 = vand.u32 %v126, 4294901760
    %1851 = vmatpush.msra.mxu0 %v1850
    %v1852 = vand.u32 %v125, 4294901760
    %1853 = vmatpush.msra.mxu0 %v1852
    %v1854 = vand.u32 %v124, 4294901760
    %1855 = vmatpush.msra.mxu0 %v1854
    %v1856 = vand.u32 %v123, 4294901760
    %1857 = vmatpush.msra.mxu0 %v1856
    %v1858 = vand.u32 %v122, 4294901760
    %1859 = vmatpush.msra.mxu0 %v1858
    %v1860 = vand.u32 %v121, 4294901760
    %1861 = vmatpush.msra.mxu0 %v1860
    %v1862 = vand.u32 %v120, 4294901760
    %1863 = vmatpush.msra.mxu0 %v1862
    %v1864 = vand.u32 %v119, 4294901760
    %1865 = vmatpush.msra.mxu0 %v1864
    %v1866 = vand.u32 %v118, 4294901760
    %1867 = vmatpush.msra.mxu0 %v1866
    %v1868 = vand.u32 %v117, 4294901760
    %1869 = vmatpush.msra.mxu0 %v1868
    %v1870 = vand.u32 %v116, 4294901760
    %1871 = vmatpush.msra.mxu0 %v1870
    %v1872 = vand.u32 %v115, 4294901760
    %1873 = vmatpush.msra.mxu0 %v1872
    %v1874 = vand.u32 %v114, 4294901760
    %1875 = vmatpush.msra.mxu0 %v1874
    %v1876 = vand.u32 %v113, 4294901760
    %1877 = vmatpush.msra.mxu0 %v1876
    %v1878 = vand.u32 %v45, 4294901760
    %1879 = vmatmul.f32.gmra.mxu0 %v1878
    %v1880 = vpop.f32.mrf.mxu0
    %v1881 = vadd.f32 %v1844, %v1880
    %1882 = vdwg.mxu0
    %v1883 = vand.u32 %v144, 4294901760
    %1884 = vmatpush.msra.mxu0 %v1883
    %v1885 = vand.u32 %v143, 4294901760
    %1886 = vmatpush.msra.mxu0 %v1885
    %v1887 = vand.u32 %v142, 4294901760
    %1888 = vmatpush.msra.mxu0 %v1887
    %v1889 = vand.u32 %v141, 4294901760
    %1890 = vmatpush.msra.mxu0 %v1889
    %v1891 = vand.u32 %v140, 4294901760
    %1892 = vmatpush.msra.mxu0 %v1891
    %v1893 = vand.u32 %v139, 4294901760
    %1894 = vmatpush.msra.mxu0 %v1893
    %v1895 = vand.u32 %v138, 4294901760
    %1896 = vmatpush.msra.mxu0 %v1895
    %v1897 = vand.u32 %v137, 4294901760
    %1898 = vmatpush.msra.mxu0 %v1897
    %v1899 = vand.u32 %v136, 4294901760
    %1900 = vmatpush.msra.mxu0 %v1899
    %v1901 = vand.u32 %v135, 4294901760
    %1902 = vmatpush.msra.mxu0 %v1901
    %v1903 = vand.u32 %v134, 4294901760
    %1904 = vmatpush.msra.mxu0 %v1903
    %v1905 = vand.u32 %v133, 4294901760
    %1906 = vmatpush.msra.mxu0 %v1905
    %v1907 = vand.u32 %v132, 4294901760
    %1908 = vmatpush.msra.mxu0 %v1907
    %v1909 = vand.u32 %v131, 4294901760
    %1910 = vmatpush.msra.mxu0 %v1909
    %v1911 = vand.u32 %v130, 4294901760
    %1912 = vmatpush.msra.mxu0 %v1911
    %v1913 = vand.u32 %v129, 4294901760
    %1914 = vmatpush.msra.mxu0 %v1913
    %v1915 = vand.u32 %v46, 4294901760
    %v1916 = vsub.f32 %v46, %v1915
    %v1917 = vand.u32 %v1916, 4294901760
    %v1918 = vsub.f32 %v1916, %v1917
    %v1919 = vand.u32 %v1918, 4294901760
    %1920 = vmatmul.f32.gmra.mxu0 %v1919
    %v1921 = vpop.f32.mrf.mxu0
    %v1922 = vadd.f32 %v1881, %v1921
    %1923 = vdwg.mxu0
    %v1924 = vand.u32 %v144, 4294901760
    %v1925 = vsub.f32 %v144, %v1924
    %v1926 = vand.u32 %v1925, 4294901760
    %v1927 = vsub.f32 %v1925, %v1926
    %v1928 = vand.u32 %v1927, 4294901760
    %1929 = vmatpush.msra.mxu0 %v1928
    %v1930 = vand.u32 %v143, 4294901760
    %v1931 = vsub.f32 %v143, %v1930
    %v1932 = vand.u32 %v1931, 4294901760
    %v1933 = vsub.f32 %v1931, %v1932
    %v1934 = vand.u32 %v1933, 4294901760
    %1935 = vmatpush.msra.mxu0 %v1934
    %v1936 = vand.u32 %v142, 4294901760
    %v1937 = vsub.f32 %v142, %v1936
    %v1938 = vand.u32 %v1937, 4294901760
    %v1939 = vsub.f32 %v1937, %v1938
    %v1940 = vand.u32 %v1939, 4294901760
    %1941 = vmatpush.msra.mxu0 %v1940
    %v1942 = vand.u32 %v141, 4294901760
    %v1943 = vsub.f32 %v141, %v1942
    %v1944 = vand.u32 %v1943, 4294901760
    %v1945 = vsub.f32 %v1943, %v1944
    %v1946 = vand.u32 %v1945, 4294901760
    %1947 = vmatpush.msra.mxu0 %v1946
    %v1948 = vand.u32 %v140, 4294901760
    %v1949 = vsub.f32 %v140, %v1948
    %v1950 = vand.u32 %v1949, 4294901760
    %v1951 = vsub.f32 %v1949, %v1950
    %v1952 = vand.u32 %v1951, 4294901760
    %1953 = vmatpush.msra.mxu0 %v1952
    %v1954 = vand.u32 %v139, 4294901760
    %v1955 = vsub.f32 %v139, %v1954
    %v1956 = vand.u32 %v1955, 4294901760
    %v1957 = vsub.f32 %v1955, %v1956
    %v1958 = vand.u32 %v1957, 4294901760
    %1959 = vmatpush.msra.mxu0 %v1958
    %v1960 = vand.u32 %v138, 4294901760
    %v1961 = vsub.f32 %v138, %v1960
    %v1962 = vand.u32 %v1961, 4294901760
    %v1963 = vsub.f32 %v1961, %v1962
    %v1964 = vand.u32 %v1963, 4294901760
    %1965 = vmatpush.msra.mxu0 %v1964
    %v1966 = vand.u32 %v137, 4294901760
    %v1967 = vsub.f32 %v137, %v1966
    %v1968 = vand.u32 %v1967, 4294901760
    %v1969 = vsub.f32 %v1967, %v1968
    %v1970 = vand.u32 %v1969, 4294901760
    %1971 = vmatpush.msra.mxu0 %v1970
    %v1972 = vand.u32 %v136, 4294901760
    %v1973 = vsub.f32 %v136, %v1972
    %v1974 = vand.u32 %v1973, 4294901760
    %v1975 = vsub.f32 %v1973, %v1974
    %v1976 = vand.u32 %v1975, 4294901760
    %1977 = vmatpush.msra.mxu0 %v1976
    %v1978 = vand.u32 %v135, 4294901760
    %v1979 = vsub.f32 %v135, %v1978
    %v1980 = vand.u32 %v1979, 4294901760
    %v1981 = vsub.f32 %v1979, %v1980
    %v1982 = vand.u32 %v1981, 4294901760
    %1983 = vmatpush.msra.mxu0 %v1982
    %v1984 = vand.u32 %v134, 4294901760
    %v1985 = vsub.f32 %v134, %v1984
    %v1986 = vand.u32 %v1985, 4294901760
    %v1987 = vsub.f32 %v1985, %v1986
    %v1988 = vand.u32 %v1987, 4294901760
    %1989 = vmatpush.msra.mxu0 %v1988
    %v1990 = vand.u32 %v133, 4294901760
    %v1991 = vsub.f32 %v133, %v1990
    %v1992 = vand.u32 %v1991, 4294901760
    %v1993 = vsub.f32 %v1991, %v1992
    %v1994 = vand.u32 %v1993, 4294901760
    %1995 = vmatpush.msra.mxu0 %v1994
    %v1996 = vand.u32 %v132, 4294901760
    %v1997 = vsub.f32 %v132, %v1996
    %v1998 = vand.u32 %v1997, 4294901760
    %v1999 = vsub.f32 %v1997, %v1998
    %v2000 = vand.u32 %v1999, 4294901760
    %2001 = vmatpush.msra.mxu0 %v2000
    %v2002 = vand.u32 %v131, 4294901760
    %v2003 = vsub.f32 %v131, %v2002
    %v2004 = vand.u32 %v2003, 4294901760
    %v2005 = vsub.f32 %v2003, %v2004
    %v2006 = vand.u32 %v2005, 4294901760
    %2007 = vmatpush.msra.mxu0 %v2006
    %v2008 = vand.u32 %v130, 4294901760
    %v2009 = vsub.f32 %v130, %v2008
    %v2010 = vand.u32 %v2009, 4294901760
    %v2011 = vsub.f32 %v2009, %v2010
    %v2012 = vand.u32 %v2011, 4294901760
    %2013 = vmatpush.msra.mxu0 %v2012
    %v2014 = vand.u32 %v129, 4294901760
    %v2015 = vsub.f32 %v129, %v2014
    %v2016 = vand.u32 %v2015, 4294901760
    %v2017 = vsub.f32 %v2015, %v2016
    %v2018 = vand.u32 %v2017, 4294901760
    %2019 = vmatpush.msra.mxu0 %v2018
    %v2020 = vand.u32 %v46, 4294901760
    %2021 = vmatmul.f32.gmra.mxu0 %v2020
    %v2022 = vpop.f32.mrf.mxu0
    %v2023 = vadd.f32 %v1922, %v2022
    %2024 = vdwg.mxu0
    %v2025 = vand.u32 %v144, 4294901760
    %v2026 = vsub.f32 %v144, %v2025
    %2027 = vmatpush.msra.mxu0 %v2026
    %v2028 = vand.u32 %v143, 4294901760
    %v2029 = vsub.f32 %v143, %v2028
    %2030 = vmatpush.msra.mxu0 %v2029
    %v2031 = vand.u32 %v142, 4294901760
    %v2032 = vsub.f32 %v142, %v2031
    %2033 = vmatpush.msra.mxu0 %v2032
    %v2034 = vand.u32 %v141, 4294901760
    %v2035 = vsub.f32 %v141, %v2034
    %2036 = vmatpush.msra.mxu0 %v2035
    %v2037 = vand.u32 %v140, 4294901760
    %v2038 = vsub.f32 %v140, %v2037
    %2039 = vmatpush.msra.mxu0 %v2038
    %v2040 = vand.u32 %v139, 4294901760
    %v2041 = vsub.f32 %v139, %v2040
    %2042 = vmatpush.msra.mxu0 %v2041
    %v2043 = vand.u32 %v138, 4294901760
    %v2044 = vsub.f32 %v138, %v2043
    %2045 = vmatpush.msra.mxu0 %v2044
    %v2046 = vand.u32 %v137, 4294901760
    %v2047 = vsub.f32 %v137, %v2046
    %2048 = vmatpush.msra.mxu0 %v2047
    %v2049 = vand.u32 %v136, 4294901760
    %v2050 = vsub.f32 %v136, %v2049
    %2051 = vmatpush.msra.mxu0 %v2050
    %v2052 = vand.u32 %v135, 4294901760
    %v2053 = vsub.f32 %v135, %v2052
    %2054 = vmatpush.msra.mxu0 %v2053
    %v2055 = vand.u32 %v134, 4294901760
    %v2056 = vsub.f32 %v134, %v2055
    %2057 = vmatpush.msra.mxu0 %v2056
    %v2058 = vand.u32 %v133, 4294901760
    %v2059 = vsub.f32 %v133, %v2058
    %2060 = vmatpush.msra.mxu0 %v2059
    %v2061 = vand.u32 %v132, 4294901760
    %v2062 = vsub.f32 %v132, %v2061
    %2063 = vmatpush.msra.mxu0 %v2062
    %v2064 = vand.u32 %v131, 4294901760
    %v2065 = vsub.f32 %v131, %v2064
    %2066 = vmatpush.msra.mxu0 %v2065
    %v2067 = vand.u32 %v130, 4294901760
    %v2068 = vsub.f32 %v130, %v2067
    %2069 = vmatpush.msra.mxu0 %v2068
    %v2070 = vand.u32 %v129, 4294901760
    %v2071 = vsub.f32 %v129, %v2070
    %2072 = vmatpush.msra.mxu0 %v2071
    %v2073 = vand.u32 %v46, 4294901760
    %v2074 = vsub.f32 %v46, %v2073
    %2075 = vmatmul.f32.gmra.mxu0 %v2074
    %v2076 = vpop.f32.mrf.mxu0
    %v2077 = vadd.f32 %v2023, %v2076
    %2078 = vdwg.mxu0
    %v2079 = vand.u32 %v144, 4294901760
    %2080 = vmatpush.msra.mxu0 %v2079
    %v2081 = vand.u32 %v143, 4294901760
    %2082 = vmatpush.msra.mxu0 %v2081
    %v2083 = vand.u32 %v142, 4294901760
    %2084 = vmatpush.msra.mxu0 %v2083
    %v2085 = vand.u32 %v141, 4294901760
    %2086 = vmatpush.msra.mxu0 %v2085
    %v2087 = vand.u32 %v140, 4294901760
    %2088 = vmatpush.msra.mxu0 %v2087
    %v2089 = vand.u32 %v139, 4294901760
    %2090 = vmatpush.msra.mxu0 %v2089
    %v2091 = vand.u32 %v138, 4294901760
    %2092 = vmatpush.msra.mxu0 %v2091
    %v2093 = vand.u32 %v137, 4294901760
    %2094 = vmatpush.msra.mxu0 %v2093
    %v2095 = vand.u32 %v136, 4294901760
    %2096 = vmatpush.msra.mxu0 %v2095
    %v2097 = vand.u32 %v135, 4294901760
    %2098 = vmatpush.msra.mxu0 %v2097
    %v2099 = vand.u32 %v134, 4294901760
    %2100 = vmatpush.msra.mxu0 %v2099
    %v2101 = vand.u32 %v133, 4294901760
    %2102 = vmatpush.msra.mxu0 %v2101
    %v2103 = vand.u32 %v132, 4294901760
    %2104 = vmatpush.msra.mxu0 %v2103
    %v2105 = vand.u32 %v131, 4294901760
    %2106 = vmatpush.msra.mxu0 %v2105
    %v2107 = vand.u32 %v130, 4294901760
    %2108 = vmatpush.msra.mxu0 %v2107
    %v2109 = vand.u32 %v129, 4294901760
    %2110 = vmatpush.msra.mxu0 %v2109
    %v2111 = vand.u32 %v46, 4294901760
    %v2112 = vsub.f32 %v46, %v2111
    %v2113 = vand.u32 %v2112, 4294901760
    %2114 = vmatmul.f32.gmra.mxu0 %v2113
    %v2115 = vpop.f32.mrf.mxu0
    %v2116 = vadd.f32 %v2077, %v2115
    %2117 = vdwg.mxu0
    %v2118 = vand.u32 %v144, 4294901760
    %v2119 = vsub.f32 %v144, %v2118
    %v2120 = vand.u32 %v2119, 4294901760
    %2121 = vmatpush.msra.mxu0 %v2120
    %v2122 = vand.u32 %v143, 4294901760
    %v2123 = vsub.f32 %v143, %v2122
    %v2124 = vand.u32 %v2123, 4294901760
    %2125 = vmatpush.msra.mxu0 %v2124
    %v2126 = vand.u32 %v142, 4294901760
    %v2127 = vsub.f32 %v142, %v2126
    %v2128 = vand.u32 %v2127, 4294901760
    %2129 = vmatpush.msra.mxu0 %v2128
    %v2130 = vand.u32 %v141, 4294901760
    %v2131 = vsub.f32 %v141, %v2130
    %v2132 = vand.u32 %v2131, 4294901760
    %2133 = vmatpush.msra.mxu0 %v2132
    %v2134 = vand.u32 %v140, 4294901760
    %v2135 = vsub.f32 %v140, %v2134
    %v2136 = vand.u32 %v2135, 4294901760
    %2137 = vmatpush.msra.mxu0 %v2136
    %v2138 = vand.u32 %v139, 4294901760
    %v2139 = vsub.f32 %v139, %v2138
    %v2140 = vand.u32 %v2139, 4294901760
    %2141 = vmatpush.msra.mxu0 %v2140
    %v2142 = vand.u32 %v138, 4294901760
    %v2143 = vsub.f32 %v138, %v2142
    %v2144 = vand.u32 %v2143, 4294901760
    %2145 = vmatpush.msra.mxu0 %v2144
    %v2146 = vand.u32 %v137, 4294901760
    %v2147 = vsub.f32 %v137, %v2146
    %v2148 = vand.u32 %v2147, 4294901760
    %2149 = vmatpush.msra.mxu0 %v2148
    %v2150 = vand.u32 %v136, 4294901760
    %v2151 = vsub.f32 %v136, %v2150
    %v2152 = vand.u32 %v2151, 4294901760
    %2153 = vmatpush.msra.mxu0 %v2152
    %v2154 = vand.u32 %v135, 4294901760
    %v2155 = vsub.f32 %v135, %v2154
    %v2156 = vand.u32 %v2155, 4294901760
    %2157 = vmatpush.msra.mxu0 %v2156
    %v2158 = vand.u32 %v134, 4294901760
    %v2159 = vsub.f32 %v134, %v2158
    %v2160 = vand.u32 %v2159, 4294901760
    %2161 = vmatpush.msra.mxu0 %v2160
    %v2162 = vand.u32 %v133, 4294901760
    %v2163 = vsub.f32 %v133, %v2162
    %v2164 = vand.u32 %v2163, 4294901760
    %2165 = vmatpush.msra.mxu0 %v2164
    %v2166 = vand.u32 %v132, 4294901760
    %v2167 = vsub.f32 %v132, %v2166
    %v2168 = vand.u32 %v2167, 4294901760
    %2169 = vmatpush.msra.mxu0 %v2168
    %v2170 = vand.u32 %v131, 4294901760
    %v2171 = vsub.f32 %v131, %v2170
    %v2172 = vand.u32 %v2171, 4294901760
    %2173 = vmatpush.msra.mxu0 %v2172
    %v2174 = vand.u32 %v130, 4294901760
    %v2175 = vsub.f32 %v130, %v2174
    %v2176 = vand.u32 %v2175, 4294901760
    %2177 = vmatpush.msra.mxu0 %v2176
    %v2178 = vand.u32 %v129, 4294901760
    %v2179 = vsub.f32 %v129, %v2178
    %v2180 = vand.u32 %v2179, 4294901760
    %2181 = vmatpush.msra.mxu0 %v2180
    %v2182 = vand.u32 %v46, 4294901760
    %2183 = vmatmul.f32.gmra.mxu0 %v2182
    %v2184 = vpop.f32.mrf.mxu0
    %v2185 = vadd.f32 %v2116, %v2184
    %2186 = vdwg.mxu0
    %v2187 = vand.u32 %v144, 4294901760
    %2188 = vmatpush.msra.mxu0 %v2187
    %v2189 = vand.u32 %v143, 4294901760
    %2190 = vmatpush.msra.mxu0 %v2189
    %v2191 = vand.u32 %v142, 4294901760
    %2192 = vmatpush.msra.mxu0 %v2191
    %v2193 = vand.u32 %v141, 4294901760
    %2194 = vmatpush.msra.mxu0 %v2193
    %v2195 = vand.u32 %v140, 4294901760
    %2196 = vmatpush.msra.mxu0 %v2195
    %v2197 = vand.u32 %v139, 4294901760
    %2198 = vmatpush.msra.mxu0 %v2197
    %v2199 = vand.u32 %v138, 4294901760
    %2200 = vmatpush.msra.mxu0 %v2199
    %v2201 = vand.u32 %v137, 4294901760
    %2202 = vmatpush.msra.mxu0 %v2201
    %v2203 = vand.u32 %v136, 4294901760
    %2204 = vmatpush.msra.mxu0 %v2203
    %v2205 = vand.u32 %v135, 4294901760
    %2206 = vmatpush.msra.mxu0 %v2205
    %v2207 = vand.u32 %v134, 4294901760
    %2208 = vmatpush.msra.mxu0 %v2207
    %v2209 = vand.u32 %v133, 4294901760
    %2210 = vmatpush.msra.mxu0 %v2209
    %v2211 = vand.u32 %v132, 4294901760
    %2212 = vmatpush.msra.mxu0 %v2211
    %v2213 = vand.u32 %v131, 4294901760
    %2214 = vmatpush.msra.mxu0 %v2213
    %v2215 = vand.u32 %v130, 4294901760
    %2216 = vmatpush.msra.mxu0 %v2215
    %v2217 = vand.u32 %v129, 4294901760
    %2218 = vmatpush.msra.mxu0 %v2217
    %v2219 = vand.u32 %v46, 4294901760
    %2220 = vmatmul.f32.gmra.mxu0 %v2219
    %v2221 = vpop.f32.mrf.mxu0
    %v2222 = vadd.f32 %v2185, %v2221
    %2223 = vdwg.mxu0
    %v2224 = vand.u32 %v160, 4294901760
    %2225 = vmatpush.msra.mxu0 %v2224
    %v2226 = vand.u32 %v159, 4294901760
    %2227 = vmatpush.msra.mxu0 %v2226
    %v2228 = vand.u32 %v158, 4294901760
    %2229 = vmatpush.msra.mxu0 %v2228
    %v2230 = vand.u32 %v157, 4294901760
    %2231 = vmatpush.msra.mxu0 %v2230
    %v2232 = vand.u32 %v156, 4294901760
    %2233 = vmatpush.msra.mxu0 %v2232
    %v2234 = vand.u32 %v155, 4294901760
    %2235 = vmatpush.msra.mxu0 %v2234
    %v2236 = vand.u32 %v154, 4294901760
    %2237 = vmatpush.msra.mxu0 %v2236
    %v2238 = vand.u32 %v153, 4294901760
    %2239 = vmatpush.msra.mxu0 %v2238
    %v2240 = vand.u32 %v152, 4294901760
    %2241 = vmatpush.msra.mxu0 %v2240
    %v2242 = vand.u32 %v151, 4294901760
    %2243 = vmatpush.msra.mxu0 %v2242
    %v2244 = vand.u32 %v150, 4294901760
    %2245 = vmatpush.msra.mxu0 %v2244
    %v2246 = vand.u32 %v149, 4294901760
    %2247 = vmatpush.msra.mxu0 %v2246
    %v2248 = vand.u32 %v148, 4294901760
    %2249 = vmatpush.msra.mxu0 %v2248
    %v2250 = vand.u32 %v147, 4294901760
    %2251 = vmatpush.msra.mxu0 %v2250
    %v2252 = vand.u32 %v146, 4294901760
    %2253 = vmatpush.msra.mxu0 %v2252
    %v2254 = vand.u32 %v145, 4294901760
    %2255 = vmatpush.msra.mxu0 %v2254
    %v2256 = vand.u32 %v47, 4294901760
    %v2257 = vsub.f32 %v47, %v2256
    %v2258 = vand.u32 %v2257, 4294901760
    %v2259 = vsub.f32 %v2257, %v2258
    %v2260 = vand.u32 %v2259, 4294901760
    %2261 = vmatmul.f32.gmra.mxu0 %v2260
    %v2262 = vpop.f32.mrf.mxu0
    %v2263 = vadd.f32 %v2222, %v2262
    %2264 = vdwg.mxu0
    %v2265 = vand.u32 %v160, 4294901760
    %v2266 = vsub.f32 %v160, %v2265
    %v2267 = vand.u32 %v2266, 4294901760
    %v2268 = vsub.f32 %v2266, %v2267
    %v2269 = vand.u32 %v2268, 4294901760
    %2270 = vmatpush.msra.mxu0 %v2269
    %v2271 = vand.u32 %v159, 4294901760
    %v2272 = vsub.f32 %v159, %v2271
    %v2273 = vand.u32 %v2272, 4294901760
    %v2274 = vsub.f32 %v2272, %v2273
    %v2275 = vand.u32 %v2274, 4294901760
    %2276 = vmatpush.msra.mxu0 %v2275
    %v2277 = vand.u32 %v158, 4294901760
    %v2278 = vsub.f32 %v158, %v2277
    %v2279 = vand.u32 %v2278, 4294901760
    %v2280 = vsub.f32 %v2278, %v2279
    %v2281 = vand.u32 %v2280, 4294901760
    %2282 = vmatpush.msra.mxu0 %v2281
    %v2283 = vand.u32 %v157, 4294901760
    %v2284 = vsub.f32 %v157, %v2283
    %v2285 = vand.u32 %v2284, 4294901760
    %v2286 = vsub.f32 %v2284, %v2285
    %v2287 = vand.u32 %v2286, 4294901760
    %2288 = vmatpush.msra.mxu0 %v2287
    %v2289 = vand.u32 %v156, 4294901760
    %v2290 = vsub.f32 %v156, %v2289
    %v2291 = vand.u32 %v2290, 4294901760
    %v2292 = vsub.f32 %v2290, %v2291
    %v2293 = vand.u32 %v2292, 4294901760
    %2294 = vmatpush.msra.mxu0 %v2293
    %v2295 = vand.u32 %v155, 4294901760
    %v2296 = vsub.f32 %v155, %v2295
    %v2297 = vand.u32 %v2296, 4294901760
    %v2298 = vsub.f32 %v2296, %v2297
    %v2299 = vand.u32 %v2298, 4294901760
    %2300 = vmatpush.msra.mxu0 %v2299
    %v2301 = vand.u32 %v154, 4294901760
    %v2302 = vsub.f32 %v154, %v2301
    %v2303 = vand.u32 %v2302, 4294901760
    %v2304 = vsub.f32 %v2302, %v2303
    %v2305 = vand.u32 %v2304, 4294901760
    %2306 = vmatpush.msra.mxu0 %v2305
    %v2307 = vand.u32 %v153, 4294901760
    %v2308 = vsub.f32 %v153, %v2307
    %v2309 = vand.u32 %v2308, 4294901760
    %v2310 = vsub.f32 %v2308, %v2309
    %v2311 = vand.u32 %v2310, 4294901760
    %2312 = vmatpush.msra.mxu0 %v2311
    %v2313 = vand.u32 %v152, 4294901760
    %v2314 = vsub.f32 %v152, %v2313
    %v2315 = vand.u32 %v2314, 4294901760
    %v2316 = vsub.f32 %v2314, %v2315
    %v2317 = vand.u32 %v2316, 4294901760
    %2318 = vmatpush.msra.mxu0 %v2317
    %v2319 = vand.u32 %v151, 4294901760
    %v2320 = vsub.f32 %v151, %v2319
    %v2321 = vand.u32 %v2320, 4294901760
    %v2322 = vsub.f32 %v2320, %v2321
    %v2323 = vand.u32 %v2322, 4294901760
    %2324 = vmatpush.msra.mxu0 %v2323
    %v2325 = vand.u32 %v150, 4294901760
    %v2326 = vsub.f32 %v150, %v2325
    %v2327 = vand.u32 %v2326, 4294901760
    %v2328 = vsub.f32 %v2326, %v2327
    %v2329 = vand.u32 %v2328, 4294901760
    %2330 = vmatpush.msra.mxu0 %v2329
    %v2331 = vand.u32 %v149, 4294901760
    %v2332 = vsub.f32 %v149, %v2331
    %v2333 = vand.u32 %v2332, 4294901760
    %v2334 = vsub.f32 %v2332, %v2333
    %v2335 = vand.u32 %v2334, 4294901760
    %2336 = vmatpush.msra.mxu0 %v2335
    %v2337 = vand.u32 %v148, 4294901760
    %v2338 = vsub.f32 %v148, %v2337
    %v2339 = vand.u32 %v2338, 4294901760
    %v2340 = vsub.f32 %v2338, %v2339
    %v2341 = vand.u32 %v2340, 4294901760
    %2342 = vmatpush.msra.mxu0 %v2341
    %v2343 = vand.u32 %v147, 4294901760
    %v2344 = vsub.f32 %v147, %v2343
    %v2345 = vand.u32 %v2344, 4294901760
    %v2346 = vsub.f32 %v2344, %v2345
    %v2347 = vand.u32 %v2346, 4294901760
    %2348 = vmatpush.msra.mxu0 %v2347
    %v2349 = vand.u32 %v146, 4294901760
    %v2350 = vsub.f32 %v146, %v2349
    %v2351 = vand.u32 %v2350, 4294901760
    %v2352 = vsub.f32 %v2350, %v2351
    %v2353 = vand.u32 %v2352, 4294901760
    %2354 = vmatpush.msra.mxu0 %v2353
    %v2355 = vand.u32 %v145, 4294901760
    %v2356 = vsub.f32 %v145, %v2355
    %v2357 = vand.u32 %v2356, 4294901760
    %v2358 = vsub.f32 %v2356, %v2357
    %v2359 = vand.u32 %v2358, 4294901760
    %2360 = vmatpush.msra.mxu0 %v2359
    %v2361 = vand.u32 %v47, 4294901760
    %2362 = vmatmul.f32.gmra.mxu0 %v2361
    %v2363 = vpop.f32.mrf.mxu0
    %v2364 = vadd.f32 %v2263, %v2363
    %2365 = vdwg.mxu0
    %v2366 = vand.u32 %v160, 4294901760
    %v2367 = vsub.f32 %v160, %v2366
    %2368 = vmatpush.msra.mxu0 %v2367
    %v2369 = vand.u32 %v159, 4294901760
    %v2370 = vsub.f32 %v159, %v2369
    %2371 = vmatpush.msra.mxu0 %v2370
    %v2372 = vand.u32 %v158, 4294901760
    %v2373 = vsub.f32 %v158, %v2372
    %2374 = vmatpush.msra.mxu0 %v2373
    %v2375 = vand.u32 %v157, 4294901760
    %v2376 = vsub.f32 %v157, %v2375
    %2377 = vmatpush.msra.mxu0 %v2376
    %v2378 = vand.u32 %v156, 4294901760
    %v2379 = vsub.f32 %v156, %v2378
    %2380 = vmatpush.msra.mxu0 %v2379
    %v2381 = vand.u32 %v155, 4294901760
    %v2382 = vsub.f32 %v155, %v2381
    %2383 = vmatpush.msra.mxu0 %v2382
    %v2384 = vand.u32 %v154, 4294901760
    %v2385 = vsub.f32 %v154, %v2384
    %2386 = vmatpush.msra.mxu0 %v2385
    %v2387 = vand.u32 %v153, 4294901760
    %v2388 = vsub.f32 %v153, %v2387
    %2389 = vmatpush.msra.mxu0 %v2388
    %v2390 = vand.u32 %v152, 4294901760
    %v2391 = vsub.f32 %v152, %v2390
    %2392 = vmatpush.msra.mxu0 %v2391
    %v2393 = vand.u32 %v151, 4294901760
    %v2394 = vsub.f32 %v151, %v2393
    %2395 = vmatpush.msra.mxu0 %v2394
    %v2396 = vand.u32 %v150, 4294901760
    %v2397 = vsub.f32 %v150, %v2396
    %2398 = vmatpush.msra.mxu0 %v2397
    %v2399 = vand.u32 %v149, 4294901760
    %v2400 = vsub.f32 %v149, %v2399
    %2401 = vmatpush.msra.mxu0 %v2400
    %v2402 = vand.u32 %v148, 4294901760
    %v2403 = vsub.f32 %v148, %v2402
    %2404 = vmatpush.msra.mxu0 %v2403
    %v2405 = vand.u32 %v147, 4294901760
    %v2406 = vsub.f32 %v147, %v2405
    %2407 = vmatpush.msra.mxu0 %v2406
    %v2408 = vand.u32 %v146, 4294901760
    %v2409 = vsub.f32 %v146, %v2408
    %2410 = vmatpush.msra.mxu0 %v2409
    %v2411 = vand.u32 %v145, 4294901760
    %v2412 = vsub.f32 %v145, %v2411
    %2413 = vmatpush.msra.mxu0 %v2412
    %v2414 = vand.u32 %v47, 4294901760
    %v2415 = vsub.f32 %v47, %v2414
    %2416 = vmatmul.f32.gmra.mxu0 %v2415
    %v2417 = vpop.f32.mrf.mxu0
    %v2418 = vadd.f32 %v2364, %v2417
    %2419 = vdwg.mxu0
    %v2420 = vand.u32 %v160, 4294901760
    %2421 = vmatpush.msra.mxu0 %v2420
    %v2422 = vand.u32 %v159, 4294901760
    %2423 = vmatpush.msra.mxu0 %v2422
    %v2424 = vand.u32 %v158, 4294901760
    %2425 = vmatpush.msra.mxu0 %v2424
    %v2426 = vand.u32 %v157, 4294901760
    %2427 = vmatpush.msra.mxu0 %v2426
    %v2428 = vand.u32 %v156, 4294901760
    %2429 = vmatpush.msra.mxu0 %v2428
    %v2430 = vand.u32 %v155, 4294901760
    %2431 = vmatpush.msra.mxu0 %v2430
    %v2432 = vand.u32 %v154, 4294901760
    %2433 = vmatpush.msra.mxu0 %v2432
    %v2434 = vand.u32 %v153, 4294901760
    %2435 = vmatpush.msra.mxu0 %v2434
    %v2436 = vand.u32 %v152, 4294901760
    %2437 = vmatpush.msra.mxu0 %v2436
    %v2438 = vand.u32 %v151, 4294901760
    %2439 = vmatpush.msra.mxu0 %v2438
    %v2440 = vand.u32 %v150, 4294901760
    %2441 = vmatpush.msra.mxu0 %v2440
    %v2442 = vand.u32 %v149, 4294901760
    %2443 = vmatpush.msra.mxu0 %v2442
    %v2444 = vand.u32 %v148, 4294901760
    %2445 = vmatpush.msra.mxu0 %v2444
    %v2446 = vand.u32 %v147, 4294901760
    %2447 = vmatpush.msra.mxu0 %v2446
    %v2448 = vand.u32 %v146, 4294901760
    %2449 = vmatpush.msra.mxu0 %v2448
    %v2450 = vand.u32 %v145, 4294901760
    %2451 = vmatpush.msra.mxu0 %v2450
    %v2452 = vand.u32 %v47, 4294901760
    %v2453 = vsub.f32 %v47, %v2452
    %v2454 = vand.u32 %v2453, 4294901760
    %2455 = vmatmul.f32.gmra.mxu0 %v2454
    %v2456 = vpop.f32.mrf.mxu0
    %v2457 = vadd.f32 %v2418, %v2456
    %2458 = vdwg.mxu0
    %v2459 = vand.u32 %v160, 4294901760
    %v2460 = vsub.f32 %v160, %v2459
    %v2461 = vand.u32 %v2460, 4294901760
    %2462 = vmatpush.msra.mxu0 %v2461
    %v2463 = vand.u32 %v159, 4294901760
    %v2464 = vsub.f32 %v159, %v2463
    %v2465 = vand.u32 %v2464, 4294901760
    %2466 = vmatpush.msra.mxu0 %v2465
    %v2467 = vand.u32 %v158, 4294901760
    %v2468 = vsub.f32 %v158, %v2467
    %v2469 = vand.u32 %v2468, 4294901760
    %2470 = vmatpush.msra.mxu0 %v2469
    %v2471 = vand.u32 %v157, 4294901760
    %v2472 = vsub.f32 %v157, %v2471
    %v2473 = vand.u32 %v2472, 4294901760
    %2474 = vmatpush.msra.mxu0 %v2473
    %v2475 = vand.u32 %v156, 4294901760
    %v2476 = vsub.f32 %v156, %v2475
    %v2477 = vand.u32 %v2476, 4294901760
    %2478 = vmatpush.msra.mxu0 %v2477
    %v2479 = vand.u32 %v155, 4294901760
    %v2480 = vsub.f32 %v155, %v2479
    %v2481 = vand.u32 %v2480, 4294901760
    %2482 = vmatpush.msra.mxu0 %v2481
    %v2483 = vand.u32 %v154, 4294901760
    %v2484 = vsub.f32 %v154, %v2483
    %v2485 = vand.u32 %v2484, 4294901760
    %2486 = vmatpush.msra.mxu0 %v2485
    %v2487 = vand.u32 %v153, 4294901760
    %v2488 = vsub.f32 %v153, %v2487
    %v2489 = vand.u32 %v2488, 4294901760
    %2490 = vmatpush.msra.mxu0 %v2489
    %v2491 = vand.u32 %v152, 4294901760
    %v2492 = vsub.f32 %v152, %v2491
    %v2493 = vand.u32 %v2492, 4294901760
    %2494 = vmatpush.msra.mxu0 %v2493
    %v2495 = vand.u32 %v151, 4294901760
    %v2496 = vsub.f32 %v151, %v2495
    %v2497 = vand.u32 %v2496, 4294901760
    %2498 = vmatpush.msra.mxu0 %v2497
    %v2499 = vand.u32 %v150, 4294901760
    %v2500 = vsub.f32 %v150, %v2499
    %v2501 = vand.u32 %v2500, 4294901760
    %2502 = vmatpush.msra.mxu0 %v2501
    %v2503 = vand.u32 %v149, 4294901760
    %v2504 = vsub.f32 %v149, %v2503
    %v2505 = vand.u32 %v2504, 4294901760
    %2506 = vmatpush.msra.mxu0 %v2505
    %v2507 = vand.u32 %v148, 4294901760
    %v2508 = vsub.f32 %v148, %v2507
    %v2509 = vand.u32 %v2508, 4294901760
    %2510 = vmatpush.msra.mxu0 %v2509
    %v2511 = vand.u32 %v147, 4294901760
    %v2512 = vsub.f32 %v147, %v2511
    %v2513 = vand.u32 %v2512, 4294901760
    %2514 = vmatpush.msra.mxu0 %v2513
    %v2515 = vand.u32 %v146, 4294901760
    %v2516 = vsub.f32 %v146, %v2515
    %v2517 = vand.u32 %v2516, 4294901760
    %2518 = vmatpush.msra.mxu0 %v2517
    %v2519 = vand.u32 %v145, 4294901760
    %v2520 = vsub.f32 %v145, %v2519
    %v2521 = vand.u32 %v2520, 4294901760
    %2522 = vmatpush.msra.mxu0 %v2521
    %v2523 = vand.u32 %v47, 4294901760
    %2524 = vmatmul.f32.gmra.mxu0 %v2523
    %v2525 = vpop.f32.mrf.mxu0
    %v2526 = vadd.f32 %v2457, %v2525
    %2527 = vdwg.mxu0
    %v2528 = vand.u32 %v160, 4294901760
    %2529 = vmatpush.msra.mxu0 %v2528
    %v2530 = vand.u32 %v159, 4294901760
    %2531 = vmatpush.msra.mxu0 %v2530
    %v2532 = vand.u32 %v158, 4294901760
    %2533 = vmatpush.msra.mxu0 %v2532
    %v2534 = vand.u32 %v157, 4294901760
    %2535 = vmatpush.msra.mxu0 %v2534
    %v2536 = vand.u32 %v156, 4294901760
    %2537 = vmatpush.msra.mxu0 %v2536
    %v2538 = vand.u32 %v155, 4294901760
    %2539 = vmatpush.msra.mxu0 %v2538
    %v2540 = vand.u32 %v154, 4294901760
    %2541 = vmatpush.msra.mxu0 %v2540
    %v2542 = vand.u32 %v153, 4294901760
    %2543 = vmatpush.msra.mxu0 %v2542
    %v2544 = vand.u32 %v152, 4294901760
    %2545 = vmatpush.msra.mxu0 %v2544
    %v2546 = vand.u32 %v151, 4294901760
    %2547 = vmatpush.msra.mxu0 %v2546
    %v2548 = vand.u32 %v150, 4294901760
    %2549 = vmatpush.msra.mxu0 %v2548
    %v2550 = vand.u32 %v149, 4294901760
    %2551 = vmatpush.msra.mxu0 %v2550
    %v2552 = vand.u32 %v148, 4294901760
    %2553 = vmatpush.msra.mxu0 %v2552
    %v2554 = vand.u32 %v147, 4294901760
    %2555 = vmatpush.msra.mxu0 %v2554
    %v2556 = vand.u32 %v146, 4294901760
    %2557 = vmatpush.msra.mxu0 %v2556
    %v2558 = vand.u32 %v145, 4294901760
    %2559 = vmatpush.msra.mxu0 %v2558
    %v2560 = vand.u32 %v47, 4294901760
    %2561 = vmatmul.f32.gmra.mxu0 %v2560
    %v2562 = vpop.f32.mrf.mxu0
    %v2563 = vadd.f32 %v2526, %v2562
    %2564 = vdwg.mxu0
    %2565 = vmatpush.msra.mxu0 0.0
    %2566 = vmatpush.msra.mxu0 0.0
    %2567 = vmatpush.msra.mxu0 0.0
    %v2568 = vand.u32 %v173, 4294901760
    %2569 = vmatpush.msra.mxu0 %v2568
    %v2570 = vand.u32 %v172, 4294901760
    %2571 = vmatpush.msra.mxu0 %v2570
    %v2572 = vand.u32 %v171, 4294901760
    %2573 = vmatpush.msra.mxu0 %v2572
    %v2574 = vand.u32 %v170, 4294901760
    %2575 = vmatpush.msra.mxu0 %v2574
    %v2576 = vand.u32 %v169, 4294901760
    %2577 = vmatpush.msra.mxu0 %v2576
    %v2578 = vand.u32 %v168, 4294901760
    %2579 = vmatpush.msra.mxu0 %v2578
    %v2580 = vand.u32 %v167, 4294901760
    %2581 = vmatpush.msra.mxu0 %v2580
    %v2582 = vand.u32 %v166, 4294901760
    %2583 = vmatpush.msra.mxu0 %v2582
    %v2584 = vand.u32 %v165, 4294901760
    %2585 = vmatpush.msra.mxu0 %v2584
    %v2586 = vand.u32 %v164, 4294901760
    %2587 = vmatpush.msra.mxu0 %v2586
    %v2588 = vand.u32 %v163, 4294901760
    %2589 = vmatpush.msra.mxu0 %v2588
    %v2590 = vand.u32 %v162, 4294901760
    %2591 = vmatpush.msra.mxu0 %v2590
    %v2592 = vand.u32 %v161, 4294901760
    %2593 = vmatpush.msra.mxu0 %v2592
    %v2594 = vand.u32 %v176, 4294901760
    %v2595 = vsub.f32 %v176, %v2594
    %v2596 = vand.u32 %v2595, 4294901760
    %v2597 = vsub.f32 %v2595, %v2596
    %v2598 = vand.u32 %v2597, 4294901760
    %2599 = vmatmul.f32.gmra.mxu0 %v2598
    %v2600 = vpop.f32.mrf.mxu0
    %v2601 = vadd.f32 %v2563, %v2600
    %2602 = vdwg.mxu0
    %2603 = vmatpush.msra.mxu0 0.0
    %2604 = vmatpush.msra.mxu0 0.0
    %2605 = vmatpush.msra.mxu0 0.0
    %v2606 = vand.u32 %v173, 4294901760
    %v2607 = vsub.f32 %v173, %v2606
    %v2608 = vand.u32 %v2607, 4294901760
    %v2609 = vsub.f32 %v2607, %v2608
    %v2610 = vand.u32 %v2609, 4294901760
    %2611 = vmatpush.msra.mxu0 %v2610
    %v2612 = vand.u32 %v172, 4294901760
    %v2613 = vsub.f32 %v172, %v2612
    %v2614 = vand.u32 %v2613, 4294901760
    %v2615 = vsub.f32 %v2613, %v2614
    %v2616 = vand.u32 %v2615, 4294901760
    %2617 = vmatpush.msra.mxu0 %v2616
    %v2618 = vand.u32 %v171, 4294901760
    %v2619 = vsub.f32 %v171, %v2618
    %v2620 = vand.u32 %v2619, 4294901760
    %v2621 = vsub.f32 %v2619, %v2620
    %v2622 = vand.u32 %v2621, 4294901760
    %2623 = vmatpush.msra.mxu0 %v2622
    %v2624 = vand.u32 %v170, 4294901760
    %v2625 = vsub.f32 %v170, %v2624
    %v2626 = vand.u32 %v2625, 4294901760
    %v2627 = vsub.f32 %v2625, %v2626
    %v2628 = vand.u32 %v2627, 4294901760
    %2629 = vmatpush.msra.mxu0 %v2628
    %v2630 = vand.u32 %v169, 4294901760
    %v2631 = vsub.f32 %v169, %v2630
    %v2632 = vand.u32 %v2631, 4294901760
    %v2633 = vsub.f32 %v2631, %v2632
    %v2634 = vand.u32 %v2633, 4294901760
    %2635 = vmatpush.msra.mxu0 %v2634
    %v2636 = vand.u32 %v168, 4294901760
    %v2637 = vsub.f32 %v168, %v2636
    %v2638 = vand.u32 %v2637, 4294901760
    %v2639 = vsub.f32 %v2637, %v2638
    %v2640 = vand.u32 %v2639, 4294901760
    %2641 = vmatpush.msra.mxu0 %v2640
    %v2642 = vand.u32 %v167, 4294901760
    %v2643 = vsub.f32 %v167, %v2642
    %v2644 = vand.u32 %v2643, 4294901760
    %v2645 = vsub.f32 %v2643, %v2644
    %v2646 = vand.u32 %v2645, 4294901760
    %2647 = vmatpush.msra.mxu0 %v2646
    %v2648 = vand.u32 %v166, 4294901760
    %v2649 = vsub.f32 %v166, %v2648
    %v2650 = vand.u32 %v2649, 4294901760
    %v2651 = vsub.f32 %v2649, %v2650
    %v2652 = vand.u32 %v2651, 4294901760
    %2653 = vmatpush.msra.mxu0 %v2652
    %v2654 = vand.u32 %v165, 4294901760
    %v2655 = vsub.f32 %v165, %v2654
    %v2656 = vand.u32 %v2655, 4294901760
    %v2657 = vsub.f32 %v2655, %v2656
    %v2658 = vand.u32 %v2657, 4294901760
    %2659 = vmatpush.msra.mxu0 %v2658
    %v2660 = vand.u32 %v164, 4294901760
    %v2661 = vsub.f32 %v164, %v2660
    %v2662 = vand.u32 %v2661, 4294901760
    %v2663 = vsub.f32 %v2661, %v2662
    %v2664 = vand.u32 %v2663, 4294901760
    %2665 = vmatpush.msra.mxu0 %v2664
    %v2666 = vand.u32 %v163, 4294901760
    %v2667 = vsub.f32 %v163, %v2666
    %v2668 = vand.u32 %v2667, 4294901760
    %v2669 = vsub.f32 %v2667, %v2668
    %v2670 = vand.u32 %v2669, 4294901760
    %2671 = vmatpush.msra.mxu0 %v2670
    %v2672 = vand.u32 %v162, 4294901760
    %v2673 = vsub.f32 %v162, %v2672
    %v2674 = vand.u32 %v2673, 4294901760
    %v2675 = vsub.f32 %v2673, %v2674
    %v2676 = vand.u32 %v2675, 4294901760
    %2677 = vmatpush.msra.mxu0 %v2676
    %v2678 = vand.u32 %v161, 4294901760
    %v2679 = vsub.f32 %v161, %v2678
    %v2680 = vand.u32 %v2679, 4294901760
    %v2681 = vsub.f32 %v2679, %v2680
    %v2682 = vand.u32 %v2681, 4294901760
    %2683 = vmatpush.msra.mxu0 %v2682
    %v2684 = vand.u32 %v176, 4294901760
    %2685 = vmatmul.f32.gmra.mxu0 %v2684
    %v2686 = vpop.f32.mrf.mxu0
    %v2687 = vadd.f32 %v2601, %v2686
    %2688 = vdwg.mxu0
    %2689 = vmatpush.msra.mxu0 0.0
    %2690 = vmatpush.msra.mxu0 0.0
    %2691 = vmatpush.msra.mxu0 0.0
    %v2692 = vand.u32 %v173, 4294901760
    %v2693 = vsub.f32 %v173, %v2692
    %2694 = vmatpush.msra.mxu0 %v2693
    %v2695 = vand.u32 %v172, 4294901760
    %v2696 = vsub.f32 %v172, %v2695
    %2697 = vmatpush.msra.mxu0 %v2696
    %v2698 = vand.u32 %v171, 4294901760
    %v2699 = vsub.f32 %v171, %v2698
    %2700 = vmatpush.msra.mxu0 %v2699
    %v2701 = vand.u32 %v170, 4294901760
    %v2702 = vsub.f32 %v170, %v2701
    %2703 = vmatpush.msra.mxu0 %v2702
    %v2704 = vand.u32 %v169, 4294901760
    %v2705 = vsub.f32 %v169, %v2704
    %2706 = vmatpush.msra.mxu0 %v2705
    %v2707 = vand.u32 %v168, 4294901760
    %v2708 = vsub.f32 %v168, %v2707
    %2709 = vmatpush.msra.mxu0 %v2708
    %v2710 = vand.u32 %v167, 4294901760
    %v2711 = vsub.f32 %v167, %v2710
    %2712 = vmatpush.msra.mxu0 %v2711
    %v2713 = vand.u32 %v166, 4294901760
    %v2714 = vsub.f32 %v166, %v2713
    %2715 = vmatpush.msra.mxu0 %v2714
    %v2716 = vand.u32 %v165, 4294901760
    %v2717 = vsub.f32 %v165, %v2716
    %2718 = vmatpush.msra.mxu0 %v2717
    %v2719 = vand.u32 %v164, 4294901760
    %v2720 = vsub.f32 %v164, %v2719
    %2721 = vmatpush.msra.mxu0 %v2720
    %v2722 = vand.u32 %v163, 4294901760
    %v2723 = vsub.f32 %v163, %v2722
    %2724 = vmatpush.msra.mxu0 %v2723
    %v2725 = vand.u32 %v162, 4294901760
    %v2726 = vsub.f32 %v162, %v2725
    %2727 = vmatpush.msra.mxu0 %v2726
    %v2728 = vand.u32 %v161, 4294901760
    %v2729 = vsub.f32 %v161, %v2728
    %2730 = vmatpush.msra.mxu0 %v2729
    %v2731 = vand.u32 %v176, 4294901760
    %v2732 = vsub.f32 %v176, %v2731
    %2733 = vmatmul.f32.gmra.mxu0 %v2732
    %v2734 = vpop.f32.mrf.mxu0
    %v2735 = vadd.f32 %v2687, %v2734
    %2736 = vdwg.mxu0
    %2737 = vmatpush.msra.mxu0 0.0
    %2738 = vmatpush.msra.mxu0 0.0
    %2739 = vmatpush.msra.mxu0 0.0
    %v2740 = vand.u32 %v173, 4294901760
    %2741 = vmatpush.msra.mxu0 %v2740
    %v2742 = vand.u32 %v172, 4294901760
    %2743 = vmatpush.msra.mxu0 %v2742
    %v2744 = vand.u32 %v171, 4294901760
    %2745 = vmatpush.msra.mxu0 %v2744
    %v2746 = vand.u32 %v170, 4294901760
    %2747 = vmatpush.msra.mxu0 %v2746
    %v2748 = vand.u32 %v169, 4294901760
    %2749 = vmatpush.msra.mxu0 %v2748
    %v2750 = vand.u32 %v168, 4294901760
    %2751 = vmatpush.msra.mxu0 %v2750
    %v2752 = vand.u32 %v167, 4294901760
    %2753 = vmatpush.msra.mxu0 %v2752
    %v2754 = vand.u32 %v166, 4294901760
    %2755 = vmatpush.msra.mxu0 %v2754
    %v2756 = vand.u32 %v165, 4294901760
    %2757 = vmatpush.msra.mxu0 %v2756
    %v2758 = vand.u32 %v164, 4294901760
    %2759 = vmatpush.msra.mxu0 %v2758
    %v2760 = vand.u32 %v163, 4294901760
    %2761 = vmatpush.msra.mxu0 %v2760
    %v2762 = vand.u32 %v162, 4294901760
    %2763 = vmatpush.msra.mxu0 %v2762
    %v2764 = vand.u32 %v161, 4294901760
    %2765 = vmatpush.msra.mxu0 %v2764
    %v2766 = vand.u32 %v176, 4294901760
    %v2767 = vsub.f32 %v176, %v2766
    %v2768 = vand.u32 %v2767, 4294901760
    %2769 = vmatmul.f32.gmra.mxu0 %v2768
    %v2770 = vpop.f32.mrf.mxu0
    %v2771 = vadd.f32 %v2735, %v2770
    %2772 = vdwg.mxu0
    %2773 = vmatpush.msra.mxu0 0.0
    %2774 = vmatpush.msra.mxu0 0.0
    %2775 = vmatpush.msra.mxu0 0.0
    %v2776 = vand.u32 %v173, 4294901760
    %v2777 = vsub.f32 %v173, %v2776
    %v2778 = vand.u32 %v2777, 4294901760
    %2779 = vmatpush.msra.mxu0 %v2778
    %v2780 = vand.u32 %v172, 4294901760
    %v2781 = vsub.f32 %v172, %v2780
    %v2782 = vand.u32 %v2781, 4294901760
    %2783 = vmatpush.msra.mxu0 %v2782
    %v2784 = vand.u32 %v171, 4294901760
    %v2785 = vsub.f32 %v171, %v2784
    %v2786 = vand.u32 %v2785, 4294901760
    %2787 = vmatpush.msra.mxu0 %v2786
    %v2788 = vand.u32 %v170, 4294901760
    %v2789 = vsub.f32 %v170, %v2788
    %v2790 = vand.u32 %v2789, 4294901760
    %2791 = vmatpush.msra.mxu0 %v2790
    %v2792 = vand.u32 %v169, 4294901760
    %v2793 = vsub.f32 %v169, %v2792
    %v2794 = vand.u32 %v2793, 4294901760
    %2795 = vmatpush.msra.mxu0 %v2794
    %v2796 = vand.u32 %v168, 4294901760
    %v2797 = vsub.f32 %v168, %v2796
    %v2798 = vand.u32 %v2797, 4294901760
    %2799 = vmatpush.msra.mxu0 %v2798
    %v2800 = vand.u32 %v167, 4294901760
    %v2801 = vsub.f32 %v167, %v2800
    %v2802 = vand.u32 %v2801, 4294901760
    %2803 = vmatpush.msra.mxu0 %v2802
    %v2804 = vand.u32 %v166, 4294901760
    %v2805 = vsub.f32 %v166, %v2804
    %v2806 = vand.u32 %v2805, 4294901760
    %2807 = vmatpush.msra.mxu0 %v2806
    %v2808 = vand.u32 %v165, 4294901760
    %v2809 = vsub.f32 %v165, %v2808
    %v2810 = vand.u32 %v2809, 4294901760
    %2811 = vmatpush.msra.mxu0 %v2810
    %v2812 = vand.u32 %v164, 4294901760
    %v2813 = vsub.f32 %v164, %v2812
    %v2814 = vand.u32 %v2813, 4294901760
    %2815 = vmatpush.msra.mxu0 %v2814
    %v2816 = vand.u32 %v163, 4294901760
    %v2817 = vsub.f32 %v163, %v2816
    %v2818 = vand.u32 %v2817, 4294901760
    %2819 = vmatpush.msra.mxu0 %v2818
    %v2820 = vand.u32 %v162, 4294901760
    %v2821 = vsub.f32 %v162, %v2820
    %v2822 = vand.u32 %v2821, 4294901760
    %2823 = vmatpush.msra.mxu0 %v2822
    %v2824 = vand.u32 %v161, 4294901760
    %v2825 = vsub.f32 %v161, %v2824
    %v2826 = vand.u32 %v2825, 4294901760
    %2827 = vmatpush.msra.mxu0 %v2826
    %v2828 = vand.u32 %v176, 4294901760
    %2829 = vmatmul.f32.gmra.mxu0 %v2828
    %v2830 = vpop.f32.mrf.mxu0
    %v2831 = vadd.f32 %v2771, %v2830
    %2832 = vdwg.mxu0
    %2833 = vmatpush.msra.mxu0 0.0
    %2834 = vmatpush.msra.mxu0 0.0
    %2835 = vmatpush.msra.mxu0 0.0
    %v2836 = vand.u32 %v173, 4294901760
    %2837 = vmatpush.msra.mxu0 %v2836
    %v2838 = vand.u32 %v172, 4294901760
    %2839 = vmatpush.msra.mxu0 %v2838
    %v2840 = vand.u32 %v171, 4294901760
    %2841 = vmatpush.msra.mxu0 %v2840
    %v2842 = vand.u32 %v170, 4294901760
    %2843 = vmatpush.msra.mxu0 %v2842
    %v2844 = vand.u32 %v169, 4294901760
    %2845 = vmatpush.msra.mxu0 %v2844
    %v2846 = vand.u32 %v168, 4294901760
    %2847 = vmatpush.msra.mxu0 %v2846
    %v2848 = vand.u32 %v167, 4294901760
    %2849 = vmatpush.msra.mxu0 %v2848
    %v2850 = vand.u32 %v166, 4294901760
    %2851 = vmatpush.msra.mxu0 %v2850
    %v2852 = vand.u32 %v165, 4294901760
    %2853 = vmatpush.msra.mxu0 %v2852
    %v2854 = vand.u32 %v164, 4294901760
    %2855 = vmatpush.msra.mxu0 %v2854
    %v2856 = vand.u32 %v163, 4294901760
    %2857 = vmatpush.msra.mxu0 %v2856
    %v2858 = vand.u32 %v162, 4294901760
    %2859 = vmatpush.msra.mxu0 %v2858
    %v2860 = vand.u32 %v161, 4294901760
    %2861 = vmatpush.msra.mxu0 %v2860
    %v2862 = vand.u32 %v176, 4294901760
    %2863 = vmatmul.f32.gmra.mxu0 %v2862
    %v2864 = vpop.f32.mrf.mxu0
    %v2865 = vadd.f32 %v2831, %v2864
    %2866 = vdwg.mxu0
    %vm2867 = vcmask 261120
    %2868 = vst.msk [vmem:[#allocation2] sm:$0xff] %vm2867, %v2865
    // Predicated region
    $region10: #{tpu_custom_call.1} parent=1 // pred_check
      _
    $region11: #{tpu_custom_call.1} parent=1 // pred_check_branch
      %2870 = sbr.rel (0) target = $region13
    $region12: #{tpu_custom_call.1} parent=1 // pred_region
      %2872 = vsyncadd [#allocation3], 0
      %s2874 = sshll.u32 [#allocation2], 4
      %s2875 = int_to_ptr.vmem [resolvable:$true] %s2874
      %s2876 = sshll.u32 %s2, 4
      %s2877 = int_to_ptr.hbm [resolvable:$true] %s2876
      %2879 = dma.vmem_to_hbm [thread:$0]  %s2875, 128, %s2877, [#allocation3]
    $region13: #{tpu_custom_call.1} parent=1 // pred_fallthru
      _
    // Predicated region
    $region14: #{tpu_custom_call.1} parent=1 // pred_check
      _
    $region15: #{tpu_custom_call.1} parent=1 // pred_check_branch
      %2881 = sbr.rel (0) target = $region17
    $region16: #{tpu_custom_call.1} parent=1 // pred_region
      %2883 = dma.done [#allocation3], 128
    $region17: #{tpu_custom_call.1} parent=1 // pred_fallthru
      _
    %2884 = vsyncpa [#allocation3], 1

</llo_original>
